<compile_context>
chip_gen: v7x
topology: tpu7x:2x2x1
jax: 0.10.0
libtpu: 0.0.40
codegen_flags: <defaults>
</compile_context>

<pallas_src>
import math
from functools import partial

import jax
import jax.numpy as jnp
import numpy as np
from jax.experimental import pallas as pl
from jax.experimental.pallas import tpu as pltpu

LN_EPS = 1e-5  # torch.nn.LayerNorm default eps


def _layer_norm(y, gamma, beta):
    mean = jnp.mean(y, axis=-1, keepdims=True)
    var = jnp.mean((y - mean) ** 2, axis=-1, keepdims=True)
    return (y - mean) * jax.lax.rsqrt(var + LN_EPS) * gamma + beta


# ----------------------------- kernel ----------------------------------------
def encoder_layer_kernel(num_heads, dim_key, dim_value, q_tile, return_attn,
                         len_ref,                       # scalar-prefetch (SMEM)
                         x_ref,                         # (1, T, D) full sequence
                         wq_ref, bq_ref, wk_ref, bk_ref, wv_ref, bv_ref,
                         wo_ref, bo_ref, g1_ref, be1_ref,
                         w1_ref, b1_ref, w2_ref, b2_ref, g2_ref, be2_ref,
                         *rest):
    if return_attn:
        out_ref, attn_ref, k_cache, v_cache, ctx_ref = rest
    else:
        out_ref, k_cache, v_cache, ctx_ref = rest
        attn_ref = None

    b = pl.program_id(0)
    qi = pl.program_id(1)
    seq_len = len_ref[b]                 # valid length of this batch element

    cd = k_cache.dtype                   # matmul-operand dtype (f32 or bf16)
    approx_recip = (cd != jnp.float32)   # fast EUP reciprocal only in bf16 mode
    T = x_ref.shape[1]
    TQ = q_tile
    H, Dk, Dv = num_heads, dim_key, dim_value

    # K/V projections: ONCE per batch element, cached in VMEM scratch and
    # reused by every query tile (qi axis must therefore be "arbitrary").
    @pl.when(qi == 0)
    def _():
        x_full = x_ref[0].astype(cd)                                   # (T, D)
        k_cache[...] = (jnp.dot(x_full, wk_ref[...],
                                preferred_element_type=jnp.float32)
                        + bk_ref[...]).astype(cd)
        v_cache[...] = (jnp.dot(x_full, wv_ref[...],
                                preferred_element_type=jnp.float32)
                        + bv_ref[...]).astype(cd)

    # Query rows (and the residual) sliced from the already-resident block.
    row0 = pl.multiple_of(qi * q_tile, q_tile)
    xq = x_ref[0, pl.ds(row0, q_tile), :]                    # (TQ, D) f32

    # Masks rebuilt in-kernel from the prefetched length (no HBM mask traffic).
    key_is_pad = jax.lax.broadcasted_iota(jnp.int32, (TQ, T), 1) >= seq_len
    row_idx = qi * q_tile + jax.lax.broadcasted_iota(jnp.int32, (TQ, 1), 0)
    npm = (row_idx < seq_len).astype(jnp.float32)            # (TQ, 1) non-pad

    # Query projection (1/sqrt(dim_key) already folded into wq/bq): one wide matmul.
    q_all = (jnp.dot(xq.astype(cd), wq_ref[...],
                     preferred_element_type=jnp.float32) + bq_ref[...]).astype(cd)

    neg_inf = jnp.float32(-jnp.inf)
    # TODO(synk): per-head score/PV matmuls keep a small-K (dim_key) contraction;
    # fully head-batched (H,T,Dk) einsums need an in-kernel major-dim relayout of
    # the (T, H*Dk) projections, left out for lowering safety.
    # TODO(synk): on v6e/v7x a bf16 exp (EUP) for the softmax is a candidate win;
    # verify the EUP slot is the saturated one on a bundle dump before switching.
    for h in range(H):
        qh = q_all[:, h * Dk:(h + 1) * Dk]                   # (TQ, Dk)
        kh = k_cache[:, h * Dk:(h + 1) * Dk]                 # (T,  Dk) cached
        vh = v_cache[:, h * Dv:(h + 1) * Dv]                 # (T,  Dv) cached
        s = jax.lax.dot_general(qh, kh, (((1,), (1,)), ((), ())),
                                preferred_element_type=jnp.float32)  # (TQ, T)
        s = jnp.where(key_is_pad, neg_inf, s)
        m = jnp.max(s, axis=-1, keepdims=True)
        e = jnp.exp(s - m)
        denom = jnp.sum(e, axis=-1, keepdims=True)
        # NOTE: a length-0 sequence gives 0/0 = NaN here, matching the PyTorch
        # reference (masked_fill(-inf) + softmax) semantics exactly.
        p = e * pl.reciprocal(denom, approx=approx_recip)
        p_cd = p.astype(cd)
        if attn_ref is not None:
            if attn_ref.dtype == cd:
                attn_ref[h, 0] = p_cd                        # reuse the single cast
            else:
                attn_ref[h, 0] = p.astype(attn_ref.dtype)
        # slice-store into scratch (plain vst) instead of a lane-dim concat
        ctx_ref[:, h * Dv:(h + 1) * Dv] = jnp.dot(p_cd, vh,
                                                  preferred_element_type=jnp.float32)

    # "concat heads -> output linear" as ONE matmul (K = H*Dv, full MXU util).
    mha = jnp.dot(ctx_ref[...].astype(cd), wo_ref[...],
                  preferred_element_type=jnp.float32) + bo_ref[...]

    # TODO(synk): nn.Dropout layers are identity here (inference semantics).
    y = _layer_norm(mha + xq, g1_ref[...], be1_ref[...]) * npm   # *= non_pad_mask

    # position-wise FFN (Conv1d k=1 == per-timestep linear), residual, LayerNorm
    h1 = jnp.maximum(
        jnp.dot(y.astype(cd), w1_ref[...], preferred_element_type=jnp.float32)
        + b1_ref[...], 0.0)
    h2 = jnp.dot(h1.astype(cd), w2_ref[...],
                 preferred_element_type=jnp.float32) + b2_ref[...]
    z = _layer_norm(h2 + y, g2_ref[...], be2_ref[...]) * npm     # *= non_pad_mask
    out_ref[0] = z.astype(out_ref.dtype)


# ----------------------------- wrapper ----------------------------------------
def encoder_layer(x, input_lengths, lp, *, num_heads, dim_key, dim_value,
                  compute_dtype=jnp.bfloat16, return_attn=True,
                  attn_dtype=jnp.bfloat16, out_dtype=None, q_block=128):
    """EncoderLayer forward. Masks are derived in-kernel from input_lengths."""
    B, T, D = x.shape
    H, Dk, Dv = num_heads, dim_key, dim_value
    out_dtype = out_dtype if out_dtype is not None else x.dtype
    (wq, bq, wk, bk, wv, bv, wo, bo,
     g1, be1, w1, b1, w2, b2, g2, be2) = lp
    Di = w1.shape[1]

    # Fold the 1/sqrt(dim_key) softmax temperature into the query projection.
    inv_temp = 1.0 / math.sqrt(Dk)
    wq = wq * inv_temp
    bq = bq * inv_temp

    # Weight matrices in the matmul compute dtype; biases / LN params stay f32.
    cd = compute_dtype
    wq, wk, wv, wo, w1, w2 = (w.astype(cd) for w in (wq, wk, wv, wo, w1, w2))
    # TODO(synk): on v7x the MXU also accepts fp8 operands; storing wq..w2 in fp8
    # (f32 accumulation) would halve weight VMEM/DMA if the accuracy budget allows.

    # Query-row tiling.  TODO(synk): if T is not a multiple of q_block we fall
    # back to a single tile; pad T (or add a ragged last tile) for very long T.
    if q_block < T and T % q_block == 0 and q_block % 8 == 0:
        tq = q_block
    else:
        tq = T
    nq = T // tq

    lengths = input_lengths.astype(jnp.int32)
    weights = (wq, bq, wk, bk, wv, bv, wo, bo, g1, be1, w1, b1, w2, b2, g2, be2)

    def _const_spec(arr):
        n = arr.ndim
        # constant block index -> single-buffered (no pointless double-buffering)
        return pl.BlockSpec(arr.shape, lambda b, qi, lens, n=n: (0,) * n,
                            pipeline_mode=pl.Buffered(1))

    in_specs = ([pl.BlockSpec((1, T, D), lambda b, qi, lens: (b, 0, 0))]  # full seq
                + [_const_spec(w) for w in weights])

    if return_attn:
        # attn emitted head-major (H, B, T, T): PyTorch (H*B, T, T) is a free reshape
        out_shape = (jax.ShapeDtypeStruct((B, T, D), out_dtype),
                     jax.ShapeDtypeStruct((H, B, T, T), attn_dtype))
        out_specs = (pl.BlockSpec((1, tq, D), lambda b, qi, lens: (b, qi, 0)),
                     pl.BlockSpec((H, 1, tq, T), lambda b, qi, lens: (0, b, qi, 0)))
    else:
        out_shape = jax.ShapeDtypeStruct((B, T, D), out_dtype)
        out_specs = pl.BlockSpec((1, tq, D), lambda b, qi, lens: (b, qi, 0))

    scratch_shapes = [pltpu.VMEM((T, H * Dk), cd),            # cached K projection
                      pltpu.VMEM((T, H * Dv), cd),            # cached V projection
                      pltpu.VMEM((tq, H * Dv), jnp.float32)]  # concat-heads context

    # Explicit VMEM budget from the real resident set (+50% margin for temporaries),
    # clamped to [32 MiB scoped-default, 128 MiB physical].  Re-derive tq for v7x
    # (64 MiB physical): tq=64-128 + bf16 attn; tq=256 fits v5e/v6e's 128 MiB.
    isz = lambda dt: jnp.dtype(dt).itemsize
    est = (2 * T * D * isz(x.dtype)                       # x block (double-buffered)
           + 2 * tq * D * isz(out_dtype)                  # out block
           + (2 * H * tq * T * isz(attn_dtype) if return_attn else 0)
           + sum(int(np.prod(w.shape)) * isz(w.dtype) for w in weights)  # 1-buffered
           + T * H * Dk * isz(cd) + T * H * Dv * isz(cd) + tq * H * Dv * 4  # scratch
           + 4 * tq * T * 4 + tq * H * Dk * isz(cd) + tq * Di * 4 + 6 * tq * D * 4)
    vmem_limit = int(min(128 << 20, max(32 << 20, int(est * 1.5))))

    kern = partial(encoder_layer_kernel, H, Dk, Dv, tq, return_attn)
    res = pl.pallas_call(
        kern,
        grid_spec=pltpu.PrefetchScalarGridSpec(
            num_scalar_prefetch=1,
            grid=(B, nq),
            in_specs=in_specs,
            out_specs=out_specs,
            scratch_shapes=scratch_shapes),
        out_shape=out_shape,
        # qi axis MUST be "arbitrary": the K/V scratch cache is written at qi == 0
        # and reused by later qi steps of the same batch element.
        compiler_params=pltpu.CompilerParams(
            dimension_semantics=("parallel", "arbitrary"),
            vmem_limit_bytes=vmem_limit),
    )(lengths, x, *weights)

    if return_attn:
        out, attn = res
        return out, attn.reshape(H * B, T, T)   # already head-major -> free reshape
    return res


# ------------------ deterministic parameter init -------------------------------
def init_layer_params(key, cfg):
    def nxt():
        nonlocal key
        key, sub = jax.random.split(key)
        return sub

    def nrm(shape, std):
        return jax.random.normal(nxt(), shape, jnp.float32) * std

    D, Dk, Dv, Di, H = (cfg['dim_model'], cfg['dim_key'], cfg['dim_value'],
                        cfg['dim_inner'], cfg['num_heads'])
    return [
        nrm((D, H * Dk), math.sqrt(2.0 / (D + Dk))),      # wq
        nrm((1, H * Dk), 0.02),                           # bq
        nrm((D, H * Dk), math.sqrt(2.0 / (D + Dk))),      # wk
        nrm((1, H * Dk), 0.02),                           # bk
        nrm((D, H * Dv), math.sqrt(2.0 / (D + Dv))),      # wv
        nrm((1, H * Dv), 0.02),                           # bv
        nrm((H * Dv, D), math.sqrt(2.0 / (H * Dv + D))),  # wo
        nrm((1, D), 0.02),                                # bo
        jnp.ones((1, D), jnp.float32),                    # ln1 gamma
        jnp.zeros((1, D), jnp.float32),                   # ln1 beta
        nrm((D, Di), 1.0 / math.sqrt(D)),                 # conv1 (k=1) as linear
        nrm((1, Di), 0.02),                               # b1
        nrm((Di, D), 1.0 / math.sqrt(Di)),                # conv2 (k=1) as linear
        nrm((1, D), 0.02),                                # b2
        jnp.ones((1, D), jnp.float32),                    # ln2 gamma
        jnp.zeros((1, D), jnp.float32),                   # ln2 beta
    ]


# ------------------ pure-JAX reference (correctness check) ---------------------
def reference_encoder_layer(x, input_lengths, lp, num_heads, dim_key, dim_value):
    B, T, D = x.shape
    H, Dk, Dv = num_heads, dim_key, dim_value
    (wq, bq, wk, bk, wv, bv, wo, bo, g1, be1, w1, b1, w2, b2, g2, be2) = lp
    valid = jnp.arange(T)[None, :] < input_lengths[:, None]
    npm = valid.astype(jnp.float32)[:, :, None]
    key_pad = jnp.logical_not(valid)[:, None, None, :]      # (B,1,1,T)
    q = (x @ wq + bq).reshape(B, T, H, Dk).transpose(0, 2, 1, 3)
    k = (x @ wk + bk).reshape(B, T, H, Dk).transpose(0, 2, 1, 3)
    v = (x @ wv + bv).reshape(B, T, H, Dv).transpose(0, 2, 1, 3)
    scores = jnp.einsum('bhqd,bhkd->bhqk', q, k) / math.sqrt(Dk)
    scores = jnp.where(key_pad, -jnp.inf, scores)
    p = jax.nn.softmax(scores, axis=-1)
    o = jnp.einsum('bhqk,bhkd->bhqd', p, v).transpose(0, 2, 1, 3).reshape(B, T, H * Dv)
    y = _layer_norm(o @ wo + bo + x, g1, be1) * npm
    h1 = jax.nn.relu(y @ w1 + b1)
    z = _layer_norm(h1 @ w2 + b2 + y, g2, be2) * npm
    attn = jnp.transpose(p, (1, 0, 2, 3)).reshape(H * B, T, T)
    return z, attn


if __name__ == "__main__":
    cfg = dict(num_heads=2, dim_model=32, dim_key=16, dim_value=16, dim_inner=64)
    B, T = 2, 16
    key = jax.random.PRNGKey(0)
    k_data, k_param = jax.random.split(key)
    x = jax.random.normal(k_data, (B, T, cfg['dim_model']), jnp.float32)
    input_lengths = jnp.array([T, 11], dtype=jnp.int32)
    params = init_layer_params(k_param, cfg)

    ref_out, ref_attn = reference_encoder_layer(
        x, input_lengths, params, cfg['num_heads'], cfg['dim_key'], cfg['dim_value'])

    # --- f32 operands, 2 query tiles (exercises the K/V scratch cache + pl.ds) ---
    out32, attn32 = encoder_layer(
        x, input_lengths, params, num_heads=cfg['num_heads'],
        dim_key=cfg['dim_key'], dim_value=cfg['dim_value'],
        compute_dtype=jnp.float32, attn_dtype=jnp.float32,
        return_attn=True, q_block=8)
    out32 = jax.block_until_ready(out32)
    attn32 = jax.block_until_ready(attn32)
    np.testing.assert_allclose(np.asarray(out32), np.asarray(ref_out), rtol=3e-3, atol=3e-3)
    np.testing.assert_allclose(np.asarray(attn32), np.asarray(ref_attn), rtol=3e-3, atol=3e-3)

    # --- default fast path: bf16 operands (f32 accum) + bf16 attention probs ---
    out16, attn16 = encoder_layer(
        x, input_lengths, params, num_heads=cfg['num_heads'],
        dim_key=cfg['dim_key'], dim_value=cfg['dim_value'], q_block=8)
    out16 = jax.block_until_ready(out16)
    np.testing.assert_allclose(np.asarray(out16).astype(np.float32),
                               np.asarray(ref_out), rtol=5e-2, atol=5e-2)
    np.testing.assert_allclose(np.asarray(attn16.astype(jnp.float32)),
                               np.asarray(ref_attn), rtol=5e-2, atol=5e-2)

    # --- pure-perf path: no attention-prob output (drops the dominant HBM write) ---
    out_na = encoder_layer(
        x, input_lengths, params, num_heads=cfg['num_heads'],
        dim_key=cfg['dim_key'], dim_value=cfg['dim_value'], return_attn=False)
    out_na = jax.block_until_ready(out_na)
    np.testing.assert_allclose(np.asarray(out_na).astype(np.float32),
                               np.asarray(ref_out), rtol=5e-2, atol=5e-2)

    print("KERNEL_OK")
</pallas_src>

<mosaic_0001>
module attributes {stable_mosaic.version = 11 : i64} {
  func.func @encoder_layer_kernel(%arg0: i32, %arg1: i32, %arg2: memref<2xi32, #tpu.memory_space<smem>>, %arg3: memref<1x16x32xf32, #tpu.memory_space<vmem>>, %arg4: memref<32x32xf32, #tpu.memory_space<vmem>>, %arg5: memref<1x32xf32, #tpu.memory_space<vmem>>, %arg6: memref<32x32xf32, #tpu.memory_space<vmem>>, %arg7: memref<1x32xf32, #tpu.memory_space<vmem>>, %arg8: memref<32x32xf32, #tpu.memory_space<vmem>>, %arg9: memref<1x32xf32, #tpu.memory_space<vmem>>, %arg10: memref<32x32xf32, #tpu.memory_space<vmem>>, %arg11: memref<1x32xf32, #tpu.memory_space<vmem>>, %arg12: memref<1x32xf32, #tpu.memory_space<vmem>>, %arg13: memref<1x32xf32, #tpu.memory_space<vmem>>, %arg14: memref<32x64xf32, #tpu.memory_space<vmem>>, %arg15: memref<1x64xf32, #tpu.memory_space<vmem>>, %arg16: memref<64x32xf32, #tpu.memory_space<vmem>>, %arg17: memref<1x32xf32, #tpu.memory_space<vmem>>, %arg18: memref<1x32xf32, #tpu.memory_space<vmem>>, %arg19: memref<1x32xf32, #tpu.memory_space<vmem>>, %arg20: memref<1x8x32xf32, #tpu.memory_space<vmem>>, %arg21: memref<2x1x8x16xf32, #tpu.memory_space<vmem>>, %arg22: memref<16x32xf32, #tpu.memory_space<vmem>>, %arg23: memref<16x32xf32, #tpu.memory_space<vmem>>, %arg24: memref<8x32xf32, #tpu.memory_space<vmem>>) attributes {dimension_semantics = [#tpu.dimension_semantics<parallel>, #tpu.dimension_semantics<arbitrary>], iteration_bounds = array<i64: 2, 2>, scalar_prefetch = 1 : i64, scratch_operands = 3 : i64, tpu.core_type = #tpu.core_type<tc>, window_params = [{transform_indices = @transform_0, window_bounds = array<i64: 1, 16, 32>}, {pipeline_mode = #tpu.pipeline_mode<synchronous>, transform_indices = @transform_1, window_bounds = array<i64: 32, 32>}, {pipeline_mode = #tpu.pipeline_mode<synchronous>, transform_indices = @transform_2, window_bounds = array<i64: 1, 32>}, {pipeline_mode = #tpu.pipeline_mode<synchronous>, transform_indices = @transform_3, window_bounds = array<i64: 32, 32>}, {pipeline_mode = #tpu.pipeline_mode<synchronous>, transform_indices = @transform_4, window_bounds = array<i64: 1, 32>}, {pipeline_mode = #tpu.pipeline_mode<synchronous>, transform_indices = @transform_5, window_bounds = array<i64: 32, 32>}, {pipeline_mode = #tpu.pipeline_mode<synchronous>, transform_indices = @transform_6, window_bounds = array<i64: 1, 32>}, {pipeline_mode = #tpu.pipeline_mode<synchronous>, transform_indices = @transform_7, window_bounds = array<i64: 32, 32>}, {pipeline_mode = #tpu.pipeline_mode<synchronous>, transform_indices = @transform_8, window_bounds = array<i64: 1, 32>}, {pipeline_mode = #tpu.pipeline_mode<synchronous>, transform_indices = @transform_9, window_bounds = array<i64: 1, 32>}, {pipeline_mode = #tpu.pipeline_mode<synchronous>, transform_indices = @transform_10, window_bounds = array<i64: 1, 32>}, {pipeline_mode = #tpu.pipeline_mode<synchronous>, transform_indices = @transform_11, window_bounds = array<i64: 32, 64>}, {pipeline_mode = #tpu.pipeline_mode<synchronous>, transform_indices = @transform_12, window_bounds = array<i64: 1, 64>}, {pipeline_mode = #tpu.pipeline_mode<synchronous>, transform_indices = @transform_13, window_bounds = array<i64: 64, 32>}, {pipeline_mode = #tpu.pipeline_mode<synchronous>, transform_indices = @transform_14, window_bounds = array<i64: 1, 32>}, {pipeline_mode = #tpu.pipeline_mode<synchronous>, transform_indices = @transform_15, window_bounds = array<i64: 1, 32>}, {pipeline_mode = #tpu.pipeline_mode<synchronous>, transform_indices = @transform_16, window_bounds = array<i64: 1, 32>}, {transform_indices = @transform_17, window_bounds = array<i64: 1, 8, 32>}, {transform_indices = @transform_18, window_bounds = array<i64: 2, 1, 8, 16>}]} {
    %0 = arith.index_cast %arg0 : i32 to index
    %1 = memref.load %arg2[%0] : memref<2xi32, #tpu.memory_space<smem>>
    %c0_i32 = arith.constant 0 : i32
    %2 = arith.cmpi eq, %arg1, %c0_i32 : i32
    %3 = arith.extui %2 : i1 to i32
    %c0_i32_0 = arith.constant 0 : i32
    %4 = arith.cmpi ne, %3, %c0_i32_0 : i32
    scf.if %4 {
      %c0_74 = arith.constant 0 : index
      %c0_75 = arith.constant 0 : index
      %c0_76 = arith.constant 0 : index
      %143 = vector.load %arg3[%c0_74, %c0_75, %c0_76] : memref<1x16x32xf32, #tpu.memory_space<vmem>>, vector<1x16x32xf32>
      %144 = vector.shape_cast %143 : vector<1x16x32xf32> to vector<16x32xf32>
      %c0_77 = arith.constant 0 : index
      %c0_78 = arith.constant 0 : index
      %145 = vector.load %arg6[%c0_77, %c0_78] : memref<32x32xf32, #tpu.memory_space<vmem>>, vector<32x32xf32>
      %cst_79 = arith.constant dense<0.000000e+00> : vector<16x32xf32>
      %146 = tpu.matmul %144, %145, %cst_79 {dimension_numbers = #tpu.dot_dimension_numbers<[1], [0], [0], [1], [0, 0, 1, 1], [], []>} : vector<16x32xf32>, vector<32x32xf32>, vector<16x32xf32> -> vector<16x32xf32>
      %c0_80 = arith.constant 0 : index
      %c0_81 = arith.constant 0 : index
      %147 = vector.load %arg7[%c0_80, %c0_81] : memref<1x32xf32, #tpu.memory_space<vmem>>, vector<1x32xf32>
      %148 = vector.broadcast %147 : vector<1x32xf32> to vector<16x32xf32>
      %149 = arith.addf %146, %148 : vector<16x32xf32>
      %c0_82 = arith.constant 0 : index
      %c0_83 = arith.constant 0 : index
      %150 = vector.load %arg22[%c0_82, %c0_83] : memref<16x32xf32, #tpu.memory_space<vmem>>, vector<16x32xf32>
      tpu.vector_store %arg22[%c0_82, %c0_83], %149 {strides = array<i32>} : memref<16x32xf32, #tpu.memory_space<vmem>>, vector<16x32xf32>,
      %c0_84 = arith.constant 0 : index
      %c0_85 = arith.constant 0 : index
      %151 = vector.load %arg8[%c0_84, %c0_85] : memref<32x32xf32, #tpu.memory_space<vmem>>, vector<32x32xf32>
      %cst_86 = arith.constant dense<0.000000e+00> : vector<16x32xf32>
      %152 = tpu.matmul %144, %151, %cst_86 {dimension_numbers = #tpu.dot_dimension_numbers<[1], [0], [0], [1], [0, 0, 1, 1], [], []>} : vector<16x32xf32>, vector<32x32xf32>, vector<16x32xf32> -> vector<16x32xf32>
      %c0_87 = arith.constant 0 : index
      %c0_88 = arith.constant 0 : index
      %153 = vector.load %arg9[%c0_87, %c0_88] : memref<1x32xf32, #tpu.memory_space<vmem>>, vector<1x32xf32>
      %154 = vector.broadcast %153 : vector<1x32xf32> to vector<16x32xf32>
      %155 = arith.addf %152, %154 : vector<16x32xf32>
      %c0_89 = arith.constant 0 : index
      %c0_90 = arith.constant 0 : index
      %156 = vector.load %arg23[%c0_89, %c0_90] : memref<16x32xf32, #tpu.memory_space<vmem>>, vector<16x32xf32>
      tpu.vector_store %arg23[%c0_89, %c0_90], %155 {strides = array<i32>} : memref<16x32xf32, #tpu.memory_space<vmem>>, vector<16x32xf32>,
    } else {
    }
    %c8_i32 = arith.constant 8 : i32
    %5 = arith.muli %arg1, %c8_i32 : i32
    %6 = tpu.assume_multiple %5, 8 : i32
    %c0 = arith.constant 0 : index
    %7 = arith.index_cast %6 : i32 to index
    %c0_1 = arith.constant 0 : index
    %8 = vector.load %arg3[%c0, %7, %c0_1] : memref<1x16x32xf32, #tpu.memory_space<vmem>>, vector<1x8x32xf32>
    %9 = vector.shape_cast %8 : vector<1x8x32xf32> to vector<8x32xf32>
    %10 = tpu.iota {dimensions = array<i32: 1>} : vector<8x16xi32>
    %11 = vector.broadcast %1 : i32 to vector<8x16xi32>
    %12 = arith.cmpi sge, %10, %11 : vector<8x16xi32>
    %c8_i32_2 = arith.constant 8 : i32
    %13 = arith.muli %arg1, %c8_i32_2 : i32
    %14 = tpu.iota {dimensions = array<i32: 0>} : vector<8x1xi32>
    %15 = vector.broadcast %13 : i32 to vector<8x1xi32>
    %16 = arith.addi %15, %14 : vector<8x1xi32>
    %17 = vector.broadcast %1 : i32 to vector<8x1xi32>
    %18 = arith.cmpi slt, %16, %17 : vector<8x1xi32>
    %19 = arith.extui %18 : vector<8x1xi1> to vector<8x1xi32>
    %20 = arith.sitofp %19 : vector<8x1xi32> to vector<8x1xf32>
    %c0_3 = arith.constant 0 : index
    %c0_4 = arith.constant 0 : index
    %21 = vector.load %arg4[%c0_3, %c0_4] : memref<32x32xf32, #tpu.memory_space<vmem>>, vector<32x32xf32>
    %cst = arith.constant dense<0.000000e+00> : vector<8x32xf32>
    %22 = tpu.matmul %9, %21, %cst {dimension_numbers = #tpu.dot_dimension_numbers<[1], [0], [0], [1], [0, 0, 1, 1], [], []>} : vector<8x32xf32>, vector<32x32xf32>, vector<8x32xf32> -> vector<8x32xf32>
    %c0_5 = arith.constant 0 : index
    %c0_6 = arith.constant 0 : index
    %23 = vector.load %arg5[%c0_5, %c0_6] : memref<1x32xf32, #tpu.memory_space<vmem>>, vector<1x32xf32>
    %24 = vector.broadcast %23 : vector<1x32xf32> to vector<8x32xf32>
    %25 = arith.addf %22, %24 : vector<8x32xf32>
    %26 = vector.extract_strided_slice %25 {offsets = [0, 0], sizes = [8, 16], strides = [1, 1]} : vector<8x32xf32> to vector<8x16xf32>
    %c0_7 = arith.constant 0 : index
    %c0_8 = arith.constant 0 : index
    %27 = vector.load %arg22[%c0_7, %c0_8] : memref<16x32xf32, #tpu.memory_space<vmem>>, vector<16x16xf32>
    %c0_9 = arith.constant 0 : index
    %c0_10 = arith.constant 0 : index
    %28 = vector.load %arg23[%c0_9, %c0_10] : memref<16x32xf32, #tpu.memory_space<vmem>>, vector<16x16xf32>
    %cst_11 = arith.constant dense<0.000000e+00> : vector<8x16xf32>
    %29 = tpu.matmul %26, %27, %cst_11 {dimension_numbers = #tpu.dot_dimension_numbers<[1], [1], [0], [0], [0, 0, 1, 0], [], []>} : vector<8x16xf32>, vector<16x16xf32>, vector<8x16xf32> -> vector<8x16xf32>
    %cst_12 = arith.constant 0xFF800000 : f32
    %30 = vector.broadcast %cst_12 : f32 to vector<8x16xf32>
    %31 = arith.select %12, %30, %29 : vector<8x16xi1>, vector<8x16xf32>
    %cst_13 = arith.constant dense<0xFF800000> : vector<8xf32>
    %32 = vector.multi_reduction <maximumf>, %31, %cst_13 [1] : vector<8x16xf32> to vector<8xf32>
    %33 = vector.shape_cast %32 : vector<8xf32> to vector<8x1xf32>
    %34 = vector.broadcast %33 : vector<8x1xf32> to vector<8x16xf32>
    %35 = arith.subf %31, %34 : vector<8x16xf32>
    %36 = math.exp %35 : vector<8x16xf32>
    %cst_14 = arith.constant dense<0.000000e+00> : vector<8xf32>
    %37 = vector.multi_reduction <add>, %36, %cst_14 [1] : vector<8x16xf32> to vector<8xf32>
    %38 = vector.shape_cast %37 : vector<8xf32> to vector<8x1xf32>
    %39 = tpu.reciprocal %38 : vector<8x1xf32> -> vector<8x1xf32>
    %40 = vector.broadcast %39 : vector<8x1xf32> to vector<8x16xf32>
    %41 = arith.mulf %36, %40 : vector<8x16xf32>
    %c0_15 = arith.constant 0 : index
    %c0_16 = arith.constant 0 : index
    %c0_17 = arith.constant 0 : index
    %c0_18 = arith.constant 0 : index
    %42 = vector.load %arg21[%c0_15, %c0_16, %c0_17, %c0_18] : memref<2x1x8x16xf32, #tpu.memory_space<vmem>>, vector<1x1x8x16xf32>
    %43 = vector.shape_cast %42 : vector<1x1x8x16xf32> to vector<8x16xf32>
    %44 = vector.shape_cast %41 : vector<8x16xf32> to vector<1x1x8x16xf32>
    tpu.vector_store %arg21[%c0_15, %c0_16, %c0_17, %c0_18], %44 {strides = array<i32>} : memref<2x1x8x16xf32, #tpu.memory_space<vmem>>, vector<1x1x8x16xf32>,
    %cst_19 = arith.constant dense<0.000000e+00> : vector<8x16xf32>
    %45 = tpu.matmul %41, %28, %cst_19 {dimension_numbers = #tpu.dot_dimension_numbers<[1], [0], [0], [1], [0, 0, 1, 1], [], []>} : vector<8x16xf32>, vector<16x16xf32>, vector<8x16xf32> -> vector<8x16xf32>
    %c0_20 = arith.constant 0 : index
    %c0_21 = arith.constant 0 : index
    %46 = vector.load %arg24[%c0_20, %c0_21] : memref<8x32xf32, #tpu.memory_space<vmem>>, vector<8x16xf32>
    tpu.vector_store %arg24[%c0_20, %c0_21], %45 {strides = array<i32>} : memref<8x32xf32, #tpu.memory_space<vmem>>, vector<8x16xf32>,
    %47 = vector.extract_strided_slice %25 {offsets = [0, 16], sizes = [8, 16], strides = [1, 1]} : vector<8x32xf32> to vector<8x16xf32>
    %c0_22 = arith.constant 0 : index
    %c16 = arith.constant 16 : index
    %48 = vector.load %arg22[%c0_22, %c16] : memref<16x32xf32, #tpu.memory_space<vmem>>, vector<16x16xf32>
    %c0_23 = arith.constant 0 : index
    %c16_24 = arith.constant 16 : index
    %49 = vector.load %arg23[%c0_23, %c16_24] : memref<16x32xf32, #tpu.memory_space<vmem>>, vector<16x16xf32>
    %cst_25 = arith.constant dense<0.000000e+00> : vector<8x16xf32>
    %50 = tpu.matmul %47, %48, %cst_25 {dimension_numbers = #tpu.dot_dimension_numbers<[1], [1], [0], [0], [0, 0, 1, 0], [], []>} : vector<8x16xf32>, vector<16x16xf32>, vector<8x16xf32> -> vector<8x16xf32>
    %cst_26 = arith.constant 0xFF800000 : f32
    %51 = vector.broadcast %cst_26 : f32 to vector<8x16xf32>
    %52 = arith.select %12, %51, %50 : vector<8x16xi1>, vector<8x16xf32>
    %cst_27 = arith.constant dense<0xFF800000> : vector<8xf32>
    %53 = vector.multi_reduction <maximumf>, %52, %cst_27 [1] : vector<8x16xf32> to vector<8xf32>
    %54 = vector.shape_cast %53 : vector<8xf32> to vector<8x1xf32>
    %55 = vector.broadcast %54 : vector<8x1xf32> to vector<8x16xf32>
    %56 = arith.subf %52, %55 : vector<8x16xf32>
    %57 = math.exp %56 : vector<8x16xf32>
    %cst_28 = arith.constant dense<0.000000e+00> : vector<8xf32>
    %58 = vector.multi_reduction <add>, %57, %cst_28 [1] : vector<8x16xf32> to vector<8xf32>
    %59 = vector.shape_cast %58 : vector<8xf32> to vector<8x1xf32>
    %60 = tpu.reciprocal %59 : vector<8x1xf32> -> vector<8x1xf32>
    %61 = vector.broadcast %60 : vector<8x1xf32> to vector<8x16xf32>
    %62 = arith.mulf %57, %61 : vector<8x16xf32>
    %c1 = arith.constant 1 : index
    %c0_29 = arith.constant 0 : index
    %c0_30 = arith.constant 0 : index
    %c0_31 = arith.constant 0 : index
    %63 = vector.load %arg21[%c1, %c0_29, %c0_30, %c0_31] : memref<2x1x8x16xf32, #tpu.memory_space<vmem>>, vector<1x1x8x16xf32>
    %64 = vector.shape_cast %63 : vector<1x1x8x16xf32> to vector<8x16xf32>
    %65 = vector.shape_cast %62 : vector<8x16xf32> to vector<1x1x8x16xf32>
    tpu.vector_store %arg21[%c1, %c0_29, %c0_30, %c0_31], %65 {strides = array<i32>} : memref<2x1x8x16xf32, #tpu.memory_space<vmem>>, vector<1x1x8x16xf32>,
    %cst_32 = arith.constant dense<0.000000e+00> : vector<8x16xf32>
    %66 = tpu.matmul %62, %49, %cst_32 {dimension_numbers = #tpu.dot_dimension_numbers<[1], [0], [0], [1], [0, 0, 1, 1], [], []>} : vector<8x16xf32>, vector<16x16xf32>, vector<8x16xf32> -> vector<8x16xf32>
    %c0_33 = arith.constant 0 : index
    %c16_34 = arith.constant 16 : index
    %67 = vector.load %arg24[%c0_33, %c16_34] : memref<8x32xf32, #tpu.memory_space<vmem>>, vector<8x16xf32>
    tpu.vector_store %arg24[%c0_33, %c16_34], %66 {strides = array<i32>} : memref<8x32xf32, #tpu.memory_space<vmem>>, vector<8x16xf32>,
    %c0_35 = arith.constant 0 : index
    %c0_36 = arith.constant 0 : index
    %68 = vector.load %arg24[%c0_35, %c0_36] : memref<8x32xf32, #tpu.memory_space<vmem>>, vector<8x32xf32>
    %c0_37 = arith.constant 0 : index
    %c0_38 = arith.constant 0 : index
    %69 = vector.load %arg10[%c0_37, %c0_38] : memref<32x32xf32, #tpu.memory_space<vmem>>, vector<32x32xf32>
    %cst_39 = arith.constant dense<0.000000e+00> : vector<8x32xf32>
    %70 = tpu.matmul %68, %69, %cst_39 {dimension_numbers = #tpu.dot_dimension_numbers<[1], [0], [0], [1], [0, 0, 1, 1], [], []>} : vector<8x32xf32>, vector<32x32xf32>, vector<8x32xf32> -> vector<8x32xf32>
    %c0_40 = arith.constant 0 : index
    %c0_41 = arith.constant 0 : index
    %71 = vector.load %arg11[%c0_40, %c0_41] : memref<1x32xf32, #tpu.memory_space<vmem>>, vector<1x32xf32>
    %72 = vector.broadcast %71 : vector<1x32xf32> to vector<8x32xf32>
    %73 = arith.addf %70, %72 : vector<8x32xf32>
    %74 = arith.addf %73, %9 : vector<8x32xf32>
    %c0_42 = arith.constant 0 : index
    %c0_43 = arith.constant 0 : index
    %75 = vector.load %arg12[%c0_42, %c0_43] : memref<1x32xf32, #tpu.memory_space<vmem>>, vector<1x32xf32>
    %c0_44 = arith.constant 0 : index
    %c0_45 = arith.constant 0 : index
    %76 = vector.load %arg13[%c0_44, %c0_45] : memref<1x32xf32, #tpu.memory_space<vmem>>, vector<1x32xf32>
    %cst_46 = arith.constant dense<0.000000e+00> : vector<8xf32>
    %77 = vector.multi_reduction <add>, %74, %cst_46 [1] : vector<8x32xf32> to vector<8xf32>
    %78 = vector.shape_cast %77 : vector<8xf32> to vector<8x1xf32>
    %cst_47 = arith.constant 3.200000e+01 : f32
    %79 = vector.broadcast %cst_47 : f32 to vector<8x1xf32>
    %80 = arith.divf %78, %79 : vector<8x1xf32>
    %81 = vector.broadcast %80 : vector<8x1xf32> to vector<8x32xf32>
    %82 = arith.subf %74, %81 : vector<8x32xf32>
    %83 = arith.mulf %82, %82 : vector<8x32xf32>
    %cst_48 = arith.constant dense<0.000000e+00> : vector<8xf32>
    %84 = vector.multi_reduction <add>, %83, %cst_48 [1] : vector<8x32xf32> to vector<8xf32>
    %85 = vector.shape_cast %84 : vector<8xf32> to vector<8x1xf32>
    %cst_49 = arith.constant 3.200000e+01 : f32
    %86 = vector.broadcast %cst_49 : f32 to vector<8x1xf32>
    %87 = arith.divf %85, %86 : vector<8x1xf32>
    %88 = vector.broadcast %80 : vector<8x1xf32> to vector<8x32xf32>
    %89 = arith.subf %74, %88 : vector<8x32xf32>
    %cst_50 = arith.constant 9.99999974E-6 : f32
    %90 = vector.broadcast %cst_50 : f32 to vector<8x1xf32>
    %91 = arith.addf %87, %90 : vector<8x1xf32>
    %92 = math.rsqrt %91 : vector<8x1xf32>
    %93 = vector.broadcast %92 : vector<8x1xf32> to vector<8x32xf32>
    %94 = arith.mulf %89, %93 : vector<8x32xf32>
    %95 = vector.broadcast %75 : vector<1x32xf32> to vector<8x32xf32>
    %96 = arith.mulf %94, %95 : vector<8x32xf32>
    %97 = vector.broadcast %76 : vector<1x32xf32> to vector<8x32xf32>
    %98 = arith.addf %96, %97 : vector<8x32xf32>
    %99 = vector.broadcast %20 : vector<8x1xf32> to vector<8x32xf32>
    %100 = arith.mulf %98, %99 : vector<8x32xf32>
    %c0_51 = arith.constant 0 : index
    %c0_52 = arith.constant 0 : index
    %101 = vector.load %arg14[%c0_51, %c0_52] : memref<32x64xf32, #tpu.memory_space<vmem>>, vector<32x64xf32>
    %cst_53 = arith.constant dense<0.000000e+00> : vector<8x64xf32>
    %102 = tpu.matmul %100, %101, %cst_53 {dimension_numbers = #tpu.dot_dimension_numbers<[1], [0], [0], [1], [0, 0, 1, 1], [], []>} : vector<8x32xf32>, vector<32x64xf32>, vector<8x64xf32> -> vector<8x64xf32>
    %c0_54 = arith.constant 0 : index
    %c0_55 = arith.constant 0 : index
    %103 = vector.load %arg15[%c0_54, %c0_55] : memref<1x64xf32, #tpu.memory_space<vmem>>, vector<1x64xf32>
    %104 = vector.broadcast %103 : vector<1x64xf32> to vector<8x64xf32>
    %105 = arith.addf %102, %104 : vector<8x64xf32>
    %cst_56 = arith.constant 0.000000e+00 : f32
    %106 = vector.broadcast %cst_56 : f32 to vector<8x64xf32>
    %107 = arith.maximumf %105, %106 : vector<8x64xf32>
    %c0_57 = arith.constant 0 : index
    %c0_58 = arith.constant 0 : index
    %108 = vector.load %arg16[%c0_57, %c0_58] : memref<64x32xf32, #tpu.memory_space<vmem>>, vector<64x32xf32>
    %cst_59 = arith.constant dense<0.000000e+00> : vector<8x32xf32>
    %109 = tpu.matmul %107, %108, %cst_59 {dimension_numbers = #tpu.dot_dimension_numbers<[1], [0], [0], [1], [0, 0, 1, 1], [], []>} : vector<8x64xf32>, vector<64x32xf32>, vector<8x32xf32> -> vector<8x32xf32>
    %c0_60 = arith.constant 0 : index
    %c0_61 = arith.constant 0 : index
    %110 = vector.load %arg17[%c0_60, %c0_61] : memref<1x32xf32, #tpu.memory_space<vmem>>, vector<1x32xf32>
    %111 = vector.broadcast %110 : vector<1x32xf32> to vector<8x32xf32>
    %112 = arith.addf %109, %111 : vector<8x32xf32>
    %113 = arith.addf %112, %100 : vector<8x32xf32>
    %c0_62 = arith.constant 0 : index
    %c0_63 = arith.constant 0 : index
    %114 = vector.load %arg18[%c0_62, %c0_63] : memref<1x32xf32, #tpu.memory_space<vmem>>, vector<1x32xf32>
    %c0_64 = arith.constant 0 : index
    %c0_65 = arith.constant 0 : index
    %115 = vector.load %arg19[%c0_64, %c0_65] : memref<1x32xf32, #tpu.memory_space<vmem>>, vector<1x32xf32>
    %cst_66 = arith.constant dense<0.000000e+00> : vector<8xf32>
    %116 = vector.multi_reduction <add>, %113, %cst_66 [1] : vector<8x32xf32> to vector<8xf32>
    %117 = vector.shape_cast %116 : vector<8xf32> to vector<8x1xf32>
    %cst_67 = arith.constant 3.200000e+01 : f32
    %118 = vector.broadcast %cst_67 : f32 to vector<8x1xf32>
    %119 = arith.divf %117, %118 : vector<8x1xf32>
    %120 = vector.broadcast %119 : vector<8x1xf32> to vector<8x32xf32>
    %121 = arith.subf %113, %120 : vector<8x32xf32>
    %122 = arith.mulf %121, %121 : vector<8x32xf32>
    %cst_68 = arith.constant dense<0.000000e+00> : vector<8xf32>
    %123 = vector.multi_reduction <add>, %122, %cst_68 [1] : vector<8x32xf32> to vector<8xf32>
    %124 = vector.shape_cast %123 : vector<8xf32> to vector<8x1xf32>
    %cst_69 = arith.constant 3.200000e+01 : f32
    %125 = vector.broadcast %cst_69 : f32 to vector<8x1xf32>
    %126 = arith.divf %124, %125 : vector<8x1xf32>
    %127 = vector.broadcast %119 : vector<8x1xf32> to vector<8x32xf32>
    %128 = arith.subf %113, %127 : vector<8x32xf32>
    %cst_70 = arith.constant 9.99999974E-6 : f32
    %129 = vector.broadcast %cst_70 : f32 to vector<8x1xf32>
    %130 = arith.addf %126, %129 : vector<8x1xf32>
    %131 = math.rsqrt %130 : vector<8x1xf32>
    %132 = vector.broadcast %131 : vector<8x1xf32> to vector<8x32xf32>
    %133 = arith.mulf %128, %132 : vector<8x32xf32>
    %134 = vector.broadcast %114 : vector<1x32xf32> to vector<8x32xf32>
    %135 = arith.mulf %133, %134 : vector<8x32xf32>
    %136 = vector.broadcast %115 : vector<1x32xf32> to vector<8x32xf32>
    %137 = arith.addf %135, %136 : vector<8x32xf32>
    %138 = vector.broadcast %20 : vector<8x1xf32> to vector<8x32xf32>
    %139 = arith.mulf %137, %138 : vector<8x32xf32>
    %c0_71 = arith.constant 0 : index
    %c0_72 = arith.constant 0 : index
    %c0_73 = arith.constant 0 : index
    %140 = vector.load %arg20[%c0_71, %c0_72, %c0_73] : memref<1x8x32xf32, #tpu.memory_space<vmem>>, vector<1x8x32xf32>
    %141 = vector.shape_cast %140 : vector<1x8x32xf32> to vector<8x32xf32>
    %142 = vector.shape_cast %139 : vector<8x32xf32> to vector<1x8x32xf32>
    tpu.vector_store %arg20[%c0_71, %c0_72, %c0_73], %142 {strides = array<i32>} : memref<1x8x32xf32, #tpu.memory_space<vmem>>, vector<1x8x32xf32>,
    return
  }
  func.func @transform_0(%arg0: i32, %arg1: i32, %arg2: memref<2xi32, #tpu.memory_space<smem>>) -> (i32, i32, i32) {
    %c0_i32 = arith.constant 0 : i32
    %c0_i32_0 = arith.constant 0 : i32
    %c0_i32_1 = arith.constant 0 : i32
    return %arg0, %c0_i32, %c0_i32_0 : i32, i32, i32
  }
  func.func @transform_1(%arg0: i32, %arg1: i32, %arg2: memref<2xi32, #tpu.memory_space<smem>>) -> (i32, i32) {
    %c0_i32 = arith.constant 0 : i32
    %c0_i32_0 = arith.constant 0 : i32
    %c0_i32_1 = arith.constant 0 : i32
    return %c0_i32, %c0_i32_0 : i32, i32
  }
  func.func @transform_2(%arg0: i32, %arg1: i32, %arg2: memref<2xi32, #tpu.memory_space<smem>>) -> (i32, i32) {
    %c0_i32 = arith.constant 0 : i32
    %c0_i32_0 = arith.constant 0 : i32
    %c0_i32_1 = arith.constant 0 : i32
    return %c0_i32, %c0_i32_0 : i32, i32
  }
  func.func @transform_3(%arg0: i32, %arg1: i32, %arg2: memref<2xi32, #tpu.memory_space<smem>>) -> (i32, i32) {
    %c0_i32 = arith.constant 0 : i32
    %c0_i32_0 = arith.constant 0 : i32
    %c0_i32_1 = arith.constant 0 : i32
    return %c0_i32, %c0_i32_0 : i32, i32
  }
  func.func @transform_4(%arg0: i32, %arg1: i32, %arg2: memref<2xi32, #tpu.memory_space<smem>>) -> (i32, i32) {
    %c0_i32 = arith.constant 0 : i32
    %c0_i32_0 = arith.constant 0 : i32
    %c0_i32_1 = arith.constant 0 : i32
    return %c0_i32, %c0_i32_0 : i32, i32
  }
  func.func @transform_5(%arg0: i32, %arg1: i32, %arg2: memref<2xi32, #tpu.memory_space<smem>>) -> (i32, i32) {
    %c0_i32 = arith.constant 0 : i32
    %c0_i32_0 = arith.constant 0 : i32
    %c0_i32_1 = arith.constant 0 : i32
    return %c0_i32, %c0_i32_0 : i32, i32
  }
  func.func @transform_6(%arg0: i32, %arg1: i32, %arg2: memref<2xi32, #tpu.memory_space<smem>>) -> (i32, i32) {
    %c0_i32 = arith.constant 0 : i32
    %c0_i32_0 = arith.constant 0 : i32
    %c0_i32_1 = arith.constant 0 : i32
    return %c0_i32, %c0_i32_0 : i32, i32
  }
  func.func @transform_7(%arg0: i32, %arg1: i32, %arg2: memref<2xi32, #tpu.memory_space<smem>>) -> (i32, i32) {
    %c0_i32 = arith.constant 0 : i32
    %c0_i32_0 = arith.constant 0 : i32
    %c0_i32_1 = arith.constant 0 : i32
    return %c0_i32, %c0_i32_0 : i32, i32
  }
  func.func @transform_8(%arg0: i32, %arg1: i32, %arg2: memref<2xi32, #tpu.memory_space<smem>>) -> (i32, i32) {
    %c0_i32 = arith.constant 0 : i32
    %c0_i32_0 = arith.constant 0 : i32
    %c0_i32_1 = arith.constant 0 : i32
    return %c0_i32, %c0_i32_0 : i32, i32
  }
  func.func @transform_9(%arg0: i32, %arg1: i32, %arg2: memref<2xi32, #tpu.memory_space<smem>>) -> (i32, i32) {
    %c0_i32 = arith.constant 0 : i32
    %c0_i32_0 = arith.constant 0 : i32
    %c0_i32_1 = arith.constant 0 : i32
    return %c0_i32, %c0_i32_0 : i32, i32
  }
  func.func @transform_10(%arg0: i32, %arg1: i32, %arg2: memref<2xi32, #tpu.memory_space<smem>>) -> (i32, i32) {
    %c0_i32 = arith.constant 0 : i32
    %c0_i32_0 = arith.constant 0 : i32
    %c0_i32_1 = arith.constant 0 : i32
    return %c0_i32, %c0_i32_0 : i32, i32
  }
  func.func @transform_11(%arg0: i32, %arg1: i32, %arg2: memref<2xi32, #tpu.memory_space<smem>>) -> (i32, i32) {
    %c0_i32 = arith.constant 0 : i32
    %c0_i32_0 = arith.constant 0 : i32
    %c0_i32_1 = arith.constant 0 : i32
    return %c0_i32, %c0_i32_0 : i32, i32
  }
  func.func @transform_12(%arg0: i32, %arg1: i32, %arg2: memref<2xi32, #tpu.memory_space<smem>>) -> (i32, i32) {
    %c0_i32 = arith.constant 0 : i32
    %c0_i32_0 = arith.constant 0 : i32
    %c0_i32_1 = arith.constant 0 : i32
    return %c0_i32, %c0_i32_0 : i32, i32
  }
  func.func @transform_13(%arg0: i32, %arg1: i32, %arg2: memref<2xi32, #tpu.memory_space<smem>>) -> (i32, i32) {
    %c0_i32 = arith.constant 0 : i32
    %c0_i32_0 = arith.constant 0 : i32
    %c0_i32_1 = arith.constant 0 : i32
    return %c0_i32, %c0_i32_0 : i32, i32
  }
  func.func @transform_14(%arg0: i32, %arg1: i32, %arg2: memref<2xi32, #tpu.memory_space<smem>>) -> (i32, i32) {
    %c0_i32 = arith.constant 0 : i32
    %c0_i32_0 = arith.constant 0 : i32
    %c0_i32_1 = arith.constant 0 : i32
    return %c0_i32, %c0_i32_0 : i32, i32
  }
  func.func @transform_15(%arg0: i32, %arg1: i32, %arg2: memref<2xi32, #tpu.memory_space<smem>>) -> (i32, i32) {
    %c0_i32 = arith.constant 0 : i32
    %c0_i32_0 = arith.constant 0 : i32
    %c0_i32_1 = arith.constant 0 : i32
    return %c0_i32, %c0_i32_0 : i32, i32
  }
  func.func @transform_16(%arg0: i32, %arg1: i32, %arg2: memref<2xi32, #tpu.memory_space<smem>>) -> (i32, i32) {
    %c0_i32 = arith.constant 0 : i32
    %c0_i32_0 = arith.constant 0 : i32
    %c0_i32_1 = arith.constant 0 : i32
    return %c0_i32, %c0_i32_0 : i32, i32
  }
  func.func @transform_17(%arg0: i32, %arg1: i32, %arg2: memref<2xi32, #tpu.memory_space<smem>>) -> (i32, i32, i32) {
    %c0_i32 = arith.constant 0 : i32
    %c0_i32_0 = arith.constant 0 : i32
    return %arg0, %arg1, %c0_i32 : i32, i32, i32
  }
  func.func @transform_18(%arg0: i32, %arg1: i32, %arg2: memref<2xi32, #tpu.memory_space<smem>>) -> (i32, i32, i32, i32) {
    %c0_i32 = arith.constant 0 : i32
    %c0_i32_0 = arith.constant 0 : i32
    %c0_i32_1 = arith.constant 0 : i32
    return %c0_i32, %arg0, %arg1, %c0_i32_0 : i32, i32, i32, i32
  }
}

</mosaic_0001>

<llo_original>
// kernel: tpu_custom_call.1
$region0: #{tpu_custom_call.1}
  #allocation0 [shape = 'u32[]', space=smem, size = 0x4, offset = 0x4, fixed_abs, tag = 'smem constant byte address 0x4 - core index']
  #allocation1 [shape = 'u32[144,128]{1,0:T(1,128)}', space=vmem, size = 0x12000, scoped, tag = 'internal scratch']
  #allocation2 [shape = 'f32[16,32]{1,0:T(8,128)}', space=vmem, size = 0x2000, scoped, tag = 'scratch operand']
  #allocation3 [shape = 'f32[16,32]{1,0:T(8,128)}', space=vmem, size = 0x2000, scoped, tag = 'scratch operand']
  #allocation4 [shape = 'f32[8,32]{1,0:T(8,128)}', space=vmem, size = 0x1000, scoped, tag = 'scratch operand']
  #allocation5 [shape = 's32[1]{0}', space=sflag, size = 0x4, scoped, tag = 'scoped memory for tpu_custom_call.1']
  #allocation6 [shape = 'u8[512]{0}', space=smem, size = 0x200, scoped, tag = 'prefetched SMEM operand 0']
  %s0 = inlined_call_operand.hbm [shape: s32[2], index: 0, kind: input, shape index: {}]
  %s1 = inlined_call_operand.vmem [shape: f32[2,16,32], index: 1, kind: input, shape index: {}]
  %s2 = inlined_call_operand.vmem [shape: f32[32,32], index: 2, kind: input, shape index: {}]
  %s3 = inlined_call_operand.vmem [shape: f32[1,32], index: 3, kind: input, shape index: {}]
  %s4 = inlined_call_operand.vmem [shape: f32[32,32], index: 4, kind: input, shape index: {}]
  %s5 = inlined_call_operand.vmem [shape: f32[1,32], index: 5, kind: input, shape index: {}]
  %s6 = inlined_call_operand.hbm [shape: f32[32,32], index: 6, kind: input, shape index: {}]
  %s7 = inlined_call_operand.vmem [shape: f32[1,32], index: 7, kind: input, shape index: {}]
  %s8 = inlined_call_operand.hbm [shape: f32[32,32], index: 8, kind: input, shape index: {}]
  %s9 = inlined_call_operand.vmem [shape: f32[1,32], index: 9, kind: input, shape index: {}]
  %s10 = inlined_call_operand.vmem [shape: f32[1,32], index: 10, kind: input, shape index: {}]
  %s11 = inlined_call_operand.vmem [shape: f32[1,32], index: 11, kind: input, shape index: {}]
  %s12 = inlined_call_operand.hbm [shape: f32[32,64], index: 12, kind: input, shape index: {}]
  %s13 = inlined_call_operand.vmem [shape: f32[1,64], index: 13, kind: input, shape index: {}]
  %s14 = inlined_call_operand.vmem [shape: f32[64,32], index: 14, kind: input, shape index: {}]
  %s15 = inlined_call_operand.vmem [shape: f32[1,32], index: 15, kind: input, shape index: {}]
  %s16 = inlined_call_operand.vmem [shape: f32[1,32], index: 16, kind: input, shape index: {}]
  %s17 = inlined_call_operand.vmem [shape: f32[1,32], index: 17, kind: input, shape index: {}]
  %s18 = inlined_call_operand.hbm [shape: f32[2,16,32], index: 18, kind: output, shape index: {0}]
  %s19 = inlined_call_operand.hbm [shape: f32[2,2,16,16], index: 19, kind: output, shape index: {1}]
  %20 = xla_tuple %s18, %s19
  %s21 = sld [smem:[#allocation0]]
  $region125: #{tpu_custom_call.1} parent=0
    _
  %s23 = ssub.s32 1, %s21
  %s24 = scalar_select 0, %s23, %s21
  %26 = dma.hbm_to_smem %s0, 16, [#allocation6], [#allocation5]
  %27 = dma.done [#allocation5], 16
  %28 = sfence
  $region1: #{tpu_custom_call.1} parent=0
    #allocation7 [shape = 'u8[16384]{0}', space=vmem, size = 0x4000, scoped, tag = 'input window, operand 6, single buffered']
    #allocation8 [shape = 's32[2]{0}', space=sflag, size = 0x8, scoped, tag = 'scoped memory for tpu_custom_call.1']
    #allocation9 [shape = 's32[2]{0}', space=sflag, size = 0x8, scoped, tag = 'scoped memory for tpu_custom_call.1']
    #allocation10 [shape = 'u8[16384]{0}', space=vmem, size = 0x4000, scoped, tag = 'input window, operand 8, single buffered']
    #allocation11 [shape = 's32[1]{0}', space=sflag, size = 0x4, scoped, tag = 'scoped memory for tpu_custom_call.1']
    #allocation12 [shape = 'u8[16384]{0}', space=vmem, size = 0x4000, scoped, tag = 'input window, operand 12, single buffered']
    #allocation13 [shape = 'u8[8192]{0}', space=vmem, size = 0x2000, scoped, tag = 'output window, operand 0']
    #allocation14 [shape = 'u8[16384]{0}', space=vmem, size = 0x4000, scoped, tag = 'output window, operand 1']
    #allocation15 [shape = 's32[2]{0}', space=sflag, size = 0x8, scoped, tag = 'scoped memory for tpu_custom_call.1']
    %29 = vsyncpa [#allocation8], 0
    %30 = vsyncpa [#allocation11], 0
    %31 = vsyncpa [#allocation9], 0
    %s32 = scalar_lea.sflag [#allocation9], 1
    %33 = vsyncpa %s32, 0
    %34 = vsyncpa [#allocation15], 0
    %s35 = scalar_lea.sflag [#allocation15], 1
    %36 = vsyncpa %s35, 0
    loop: start=0, step=1, limit=6
    $region2: #{tpu_custom_call.1} parent=1 // loop_pre_header
      _
    $region3: #{tpu_custom_call.1} parent=1 // loop_header
      %s38 = sphi 0, %s42
      %p39 = scmp.ge.s32.totalorder %s38, 6
      %s45 = sphi 0, %s57
      %s46 = sphi 0, %s53
      %s47 = sphi 0, %s45
      %s48 = sphi 0, %s46
      %s49 = sphi 0, %s47
      %s50 = sphi 0, %s48
      %s60 = sphi 0, %s62
      %s63 = sphi 0, %s60
      %s64 = sphi 0, %s63
      %s80 = sphi 0, %s64
      %s84 = sphi 0, %s84
      %s86 = sphi 0, %s84
      %s87 = sphi 0, %s86
      %s101 = sphi 0, %s87
      %s105 = sphi 0, %s105
      %s107 = sphi 0, %s105
      %s108 = sphi 0, %s107
      %s122 = sphi 0, %s108
      %s126 = sphi 0, %s126
      %s128 = sphi 0, %s126
      %s129 = sphi 0, %s128
      %s143 = sphi 0, %s129
      %s147 = sphi 0, %s147
      %s149 = sphi 0, %s147
      %s150 = sphi 0, %s149
      %s164 = sphi 0, %s150
      %s168 = sphi 0, %s168
      %s170 = sphi 0, %s168
      %s171 = sphi 0, %s170
      %s185 = sphi 0, %s171
      %s189 = sphi 0, %s189
      %s191 = sphi 0, %s189
      %s192 = sphi 0, %s191
      %s206 = sphi 0, %s192
      %s210 = sphi 0, %s210
      %s212 = sphi 0, %s210
      %s213 = sphi 0, %s212
      %s227 = sphi 0, %s213
      %s231 = sphi 0, %s231
      %s233 = sphi 0, %s231
      %s234 = sphi 0, %s233
      %s248 = sphi 0, %s234
      %s252 = sphi 0, %s252
      %s254 = sphi 0, %s252
      %s255 = sphi 0, %s254
      %s269 = sphi 0, %s255
      %s273 = sphi 0, %s273
      %s275 = sphi 0, %s273
      %s276 = sphi 0, %s275
      %s290 = sphi 0, %s276
      %s294 = sphi 0, %s294
      %s296 = sphi 0, %s294
      %s297 = sphi 0, %s296
      %s311 = sphi 0, %s297
      %s315 = sphi 0, %s315
      %s317 = sphi 0, %s315
      %s318 = sphi 0, %s317
      %s332 = sphi 0, %s318
      %s336 = sphi 0, %s336
      %s338 = sphi 0, %s336
      %s339 = sphi 0, %s338
      %s353 = sphi 0, %s339
      %s357 = sphi 0, %s357
      %s359 = sphi 0, %s357
      %s360 = sphi 0, %s359
      %s374 = sphi 0, %s360
      %s378 = sphi 0, %s378
      %s380 = sphi 0, %s378
      %s381 = sphi 0, %s380
      %s395 = sphi 0, %s381
      %s399 = sphi 0, %s399
      %s401 = sphi 0, %s399
      %s402 = sphi 0, %s401
      %s416 = sphi 0, %s402
      %s424 = sphi 0, %s426
      %s427 = sphi 0, %s424
      %s428 = sphi 0, %s427
      %s444 = sphi 0, %s428
      %s452 = sphi 0, %s454
      %s455 = sphi 0, %s452
      %s456 = sphi 0, %s455
      %s472 = sphi 0, %s456
    $region4: #{tpu_custom_call.1} parent=1 // loop_header_branch
      %41 = sbr.rel (%p39) target = $region8
    $region5: #{tpu_custom_call.1} parent=1 // loop_body
      %s43 = ssub.s32 %s38, 1
      %s44 = ssub.s32 %s38, 2
      %s51 = sadd.s32 1, %s46
      %p52 = scmp.ge.s32.totalorder %s51, 2
      %s53 = scalar_select %p52, 0, %s51
      %s54 = sadd.s32 1, %s45
      %s55 = scalar_select %p52, %s54, %s45
      %p56 = scmp.ge.s32.totalorder %s55, 2
      %s57 = scalar_select %p56, 0, %s55
      %s58 = ssub.s32 %s45, %s57
      %p59 = scmp.eq.s32.totalorder %s58, 0
      %s61 = sadd.s32 %s60, 1
      %s62 = scalar_select %p59, %s60, %s61
      %p65 = pneg %p59
      %p66 = scmp.eq.s32.totalorder %s38, 3
      %p67 = por %p65, %p66
      %p68 = scmp.ne.s32.totalorder %s60, %s63
      %p69 = scmp.eq.s32.totalorder %s38, 0
      %p70 = por %p68, %p69
      %p71 = scmp.ne.s32.totalorder %s60, %s63
      %p72 = scmp.eq.s32.totalorder %s43, 3
      %p73 = por %p71, %p72
      %p74 = scmp.ne.s32.totalorder %s63, %s64
      %p75 = scmp.eq.s32.totalorder %s43, 0
      %p76 = por %p74, %p75
      %p77 = scmp.ne.s32.totalorder %s63, %s64
      %p78 = scmp.eq.s32.totalorder %s44, 3
      %p79 = por %p77, %p78
      %p81 = scmp.ne.s32.totalorder %s64, %s80
      %p82 = scmp.eq.s32.totalorder %s44, 0
      %p83 = por %p81, %p82
      %s85 = sadd.s32 %s84, 1
      %p88 = scmp.eq.s32.totalorder %s38, 3
      %p89 = scmp.ne.s32.totalorder %s84, %s86
      %p90 = scmp.eq.s32.totalorder %s38, 0
      %p91 = por %p89, %p90
      %p92 = scmp.ne.s32.totalorder %s84, %s86
      %p93 = scmp.eq.s32.totalorder %s43, 3
      %p94 = por %p92, %p93
      %p95 = scmp.ne.s32.totalorder %s86, %s87
      %p96 = scmp.eq.s32.totalorder %s43, 0
      %p97 = por %p95, %p96
      %p98 = scmp.ne.s32.totalorder %s86, %s87
      %p99 = scmp.eq.s32.totalorder %s44, 3
      %p100 = por %p98, %p99
      %p102 = scmp.ne.s32.totalorder %s87, %s101
      %p103 = scmp.eq.s32.totalorder %s44, 0
      %p104 = por %p102, %p103
      %s106 = sadd.s32 %s105, 1
      %p109 = scmp.eq.s32.totalorder %s38, 3
      %p110 = scmp.ne.s32.totalorder %s105, %s107
      %p111 = scmp.eq.s32.totalorder %s38, 0
      %p112 = por %p110, %p111
      %p113 = scmp.ne.s32.totalorder %s105, %s107
      %p114 = scmp.eq.s32.totalorder %s43, 3
      %p115 = por %p113, %p114
      %p116 = scmp.ne.s32.totalorder %s107, %s108
      %p117 = scmp.eq.s32.totalorder %s43, 0
      %p118 = por %p116, %p117
      %p119 = scmp.ne.s32.totalorder %s107, %s108
      %p120 = scmp.eq.s32.totalorder %s44, 3
      %p121 = por %p119, %p120
      %p123 = scmp.ne.s32.totalorder %s108, %s122
      %p124 = scmp.eq.s32.totalorder %s44, 0
      %p125 = por %p123, %p124
      %s127 = sadd.s32 %s126, 1
      %p130 = scmp.eq.s32.totalorder %s38, 3
      %p131 = scmp.ne.s32.totalorder %s126, %s128
      %p132 = scmp.eq.s32.totalorder %s38, 0
      %p133 = por %p131, %p132
      %p134 = scmp.ne.s32.totalorder %s126, %s128
      %p135 = scmp.eq.s32.totalorder %s43, 3
      %p136 = por %p134, %p135
      %p137 = scmp.ne.s32.totalorder %s128, %s129
      %p138 = scmp.eq.s32.totalorder %s43, 0
      %p139 = por %p137, %p138
      %p140 = scmp.ne.s32.totalorder %s128, %s129
      %p141 = scmp.eq.s32.totalorder %s44, 3
      %p142 = por %p140, %p141
      %p144 = scmp.ne.s32.totalorder %s129, %s143
      %p145 = scmp.eq.s32.totalorder %s44, 0
      %p146 = por %p144, %p145
      %s148 = sadd.s32 %s147, 1
      %p151 = scmp.eq.s32.totalorder %s38, 3
      %p152 = scmp.ne.s32.totalorder %s147, %s149
      %p153 = scmp.eq.s32.totalorder %s38, 0
      %p154 = por %p152, %p153
      %p155 = scmp.ne.s32.totalorder %s147, %s149
      %p156 = scmp.eq.s32.totalorder %s43, 3
      %p157 = por %p155, %p156
      %p158 = scmp.ne.s32.totalorder %s149, %s150
      %p159 = scmp.eq.s32.totalorder %s43, 0
      %p160 = por %p158, %p159
      %p161 = scmp.ne.s32.totalorder %s149, %s150
      %p162 = scmp.eq.s32.totalorder %s44, 3
      %p163 = por %p161, %p162
      %p165 = scmp.ne.s32.totalorder %s150, %s164
      %p166 = scmp.eq.s32.totalorder %s44, 0
      %p167 = por %p165, %p166
      %s169 = sadd.s32 %s168, 1
      %p172 = scmp.eq.s32.totalorder %s38, 3
      %p173 = scmp.ne.s32.totalorder %s168, %s170
      %p174 = scmp.eq.s32.totalorder %s38, 0
      %p175 = por %p173, %p174
      %p176 = scmp.ne.s32.totalorder %s168, %s170
      %p177 = scmp.eq.s32.totalorder %s43, 3
      %p178 = por %p176, %p177
      %p179 = scmp.ne.s32.totalorder %s170, %s171
      %p180 = scmp.eq.s32.totalorder %s43, 0
      %p181 = por %p179, %p180
      %p182 = scmp.ne.s32.totalorder %s170, %s171
      %p183 = scmp.eq.s32.totalorder %s44, 3
      %p184 = por %p182, %p183
      %p186 = scmp.ne.s32.totalorder %s171, %s185
      %p187 = scmp.eq.s32.totalorder %s44, 0
      %p188 = por %p186, %p187
      %s190 = sadd.s32 %s189, 1
      %p193 = scmp.eq.s32.totalorder %s38, 3
      %p194 = scmp.ne.s32.totalorder %s189, %s191
      %p195 = scmp.eq.s32.totalorder %s38, 0
      %p196 = por %p194, %p195
      %p197 = scmp.ne.s32.totalorder %s189, %s191
      %p198 = scmp.eq.s32.totalorder %s43, 3
      %p199 = por %p197, %p198
      %p200 = scmp.ne.s32.totalorder %s191, %s192
      %p201 = scmp.eq.s32.totalorder %s43, 0
      %p202 = por %p200, %p201
      %p203 = scmp.ne.s32.totalorder %s191, %s192
      %p204 = scmp.eq.s32.totalorder %s44, 3
      %p205 = por %p203, %p204
      %p207 = scmp.ne.s32.totalorder %s192, %s206
      %p208 = scmp.eq.s32.totalorder %s44, 0
      %p209 = por %p207, %p208
      %s211 = sadd.s32 %s210, 1
      %p214 = scmp.eq.s32.totalorder %s38, 3
      %p215 = scmp.ne.s32.totalorder %s210, %s212
      %p216 = scmp.eq.s32.totalorder %s38, 0
      %p217 = por %p215, %p216
      %p218 = scmp.ne.s32.totalorder %s210, %s212
      %p219 = scmp.eq.s32.totalorder %s43, 3
      %p220 = por %p218, %p219
      %p221 = scmp.ne.s32.totalorder %s212, %s213
      %p222 = scmp.eq.s32.totalorder %s43, 0
      %p223 = por %p221, %p222
      %p224 = scmp.ne.s32.totalorder %s212, %s213
      %p225 = scmp.eq.s32.totalorder %s44, 3
      %p226 = por %p224, %p225
      %p228 = scmp.ne.s32.totalorder %s213, %s227
      %p229 = scmp.eq.s32.totalorder %s44, 0
      %p230 = por %p228, %p229
      %s232 = sadd.s32 %s231, 1
      %p235 = scmp.eq.s32.totalorder %s38, 3
      %p236 = scmp.ne.s32.totalorder %s231, %s233
      %p237 = scmp.eq.s32.totalorder %s38, 0
      %p238 = por %p236, %p237
      %p239 = scmp.ne.s32.totalorder %s231, %s233
      %p240 = scmp.eq.s32.totalorder %s43, 3
      %p241 = por %p239, %p240
      %p242 = scmp.ne.s32.totalorder %s233, %s234
      %p243 = scmp.eq.s32.totalorder %s43, 0
      %p244 = por %p242, %p243
      %p245 = scmp.ne.s32.totalorder %s233, %s234
      %p246 = scmp.eq.s32.totalorder %s44, 3
      %p247 = por %p245, %p246
      %p249 = scmp.ne.s32.totalorder %s234, %s248
      %p250 = scmp.eq.s32.totalorder %s44, 0
      %p251 = por %p249, %p250
      %s253 = sadd.s32 %s252, 1
      %p256 = scmp.eq.s32.totalorder %s38, 3
      %p257 = scmp.ne.s32.totalorder %s252, %s254
      %p258 = scmp.eq.s32.totalorder %s38, 0
      %p259 = por %p257, %p258
      %p260 = scmp.ne.s32.totalorder %s252, %s254
      %p261 = scmp.eq.s32.totalorder %s43, 3
      %p262 = por %p260, %p261
      %p263 = scmp.ne.s32.totalorder %s254, %s255
      %p264 = scmp.eq.s32.totalorder %s43, 0
      %p265 = por %p263, %p264
      %p266 = scmp.ne.s32.totalorder %s254, %s255
      %p267 = scmp.eq.s32.totalorder %s44, 3
      %p268 = por %p266, %p267
      %p270 = scmp.ne.s32.totalorder %s255, %s269
      %p271 = scmp.eq.s32.totalorder %s44, 0
      %p272 = por %p270, %p271
      %s274 = sadd.s32 %s273, 1
      %p277 = scmp.eq.s32.totalorder %s38, 3
      %p278 = scmp.ne.s32.totalorder %s273, %s275
      %p279 = scmp.eq.s32.totalorder %s38, 0
      %p280 = por %p278, %p279
      %p281 = scmp.ne.s32.totalorder %s273, %s275
      %p282 = scmp.eq.s32.totalorder %s43, 3
      %p283 = por %p281, %p282
      %p284 = scmp.ne.s32.totalorder %s275, %s276
      %p285 = scmp.eq.s32.totalorder %s43, 0
      %p286 = por %p284, %p285
      %p287 = scmp.ne.s32.totalorder %s275, %s276
      %p288 = scmp.eq.s32.totalorder %s44, 3
      %p289 = por %p287, %p288
      %p291 = scmp.ne.s32.totalorder %s276, %s290
      %p292 = scmp.eq.s32.totalorder %s44, 0
      %p293 = por %p291, %p292
      %s295 = sadd.s32 %s294, 1
      %p298 = scmp.eq.s32.totalorder %s38, 3
      %p299 = scmp.ne.s32.totalorder %s294, %s296
      %p300 = scmp.eq.s32.totalorder %s38, 0
      %p301 = por %p299, %p300
      %p302 = scmp.ne.s32.totalorder %s294, %s296
      %p303 = scmp.eq.s32.totalorder %s43, 3
      %p304 = por %p302, %p303
      %p305 = scmp.ne.s32.totalorder %s296, %s297
      %p306 = scmp.eq.s32.totalorder %s43, 0
      %p307 = por %p305, %p306
      %p308 = scmp.ne.s32.totalorder %s296, %s297
      %p309 = scmp.eq.s32.totalorder %s44, 3
      %p310 = por %p308, %p309
      %p312 = scmp.ne.s32.totalorder %s297, %s311
      %p313 = scmp.eq.s32.totalorder %s44, 0
      %p314 = por %p312, %p313
      %s316 = sadd.s32 %s315, 1
      %p319 = scmp.eq.s32.totalorder %s38, 3
      %p320 = scmp.ne.s32.totalorder %s315, %s317
      %p321 = scmp.eq.s32.totalorder %s38, 0
      %p322 = por %p320, %p321
      %p323 = scmp.ne.s32.totalorder %s315, %s317
      %p324 = scmp.eq.s32.totalorder %s43, 3
      %p325 = por %p323, %p324
      %p326 = scmp.ne.s32.totalorder %s317, %s318
      %p327 = scmp.eq.s32.totalorder %s43, 0
      %p328 = por %p326, %p327
      %p329 = scmp.ne.s32.totalorder %s317, %s318
      %p330 = scmp.eq.s32.totalorder %s44, 3
      %p331 = por %p329, %p330
      %p333 = scmp.ne.s32.totalorder %s318, %s332
      %p334 = scmp.eq.s32.totalorder %s44, 0
      %p335 = por %p333, %p334
      %s337 = sadd.s32 %s336, 1
      %p340 = scmp.eq.s32.totalorder %s38, 3
      %p341 = scmp.ne.s32.totalorder %s336, %s338
      %p342 = scmp.eq.s32.totalorder %s38, 0
      %p343 = por %p341, %p342
      %p344 = scmp.ne.s32.totalorder %s336, %s338
      %p345 = scmp.eq.s32.totalorder %s43, 3
      %p346 = por %p344, %p345
      %p347 = scmp.ne.s32.totalorder %s338, %s339
      %p348 = scmp.eq.s32.totalorder %s43, 0
      %p349 = por %p347, %p348
      %p350 = scmp.ne.s32.totalorder %s338, %s339
      %p351 = scmp.eq.s32.totalorder %s44, 3
      %p352 = por %p350, %p351
      %p354 = scmp.ne.s32.totalorder %s339, %s353
      %p355 = scmp.eq.s32.totalorder %s44, 0
      %p356 = por %p354, %p355
      %s358 = sadd.s32 %s357, 1
      %p361 = scmp.eq.s32.totalorder %s38, 3
      %p362 = scmp.ne.s32.totalorder %s357, %s359
      %p363 = scmp.eq.s32.totalorder %s38, 0
      %p364 = por %p362, %p363
      %p365 = scmp.ne.s32.totalorder %s357, %s359
      %p366 = scmp.eq.s32.totalorder %s43, 3
      %p367 = por %p365, %p366
      %p368 = scmp.ne.s32.totalorder %s359, %s360
      %p369 = scmp.eq.s32.totalorder %s43, 0
      %p370 = por %p368, %p369
      %p371 = scmp.ne.s32.totalorder %s359, %s360
      %p372 = scmp.eq.s32.totalorder %s44, 3
      %p373 = por %p371, %p372
      %p375 = scmp.ne.s32.totalorder %s360, %s374
      %p376 = scmp.eq.s32.totalorder %s44, 0
      %p377 = por %p375, %p376
      %s379 = sadd.s32 %s378, 1
      %p382 = scmp.eq.s32.totalorder %s38, 3
      %p383 = scmp.ne.s32.totalorder %s378, %s380
      %p384 = scmp.eq.s32.totalorder %s38, 0
      %p385 = por %p383, %p384
      %p386 = scmp.ne.s32.totalorder %s378, %s380
      %p387 = scmp.eq.s32.totalorder %s43, 3
      %p388 = por %p386, %p387
      %p389 = scmp.ne.s32.totalorder %s380, %s381
      %p390 = scmp.eq.s32.totalorder %s43, 0
      %p391 = por %p389, %p390
      %p392 = scmp.ne.s32.totalorder %s380, %s381
      %p393 = scmp.eq.s32.totalorder %s44, 3
      %p394 = por %p392, %p393
      %p396 = scmp.ne.s32.totalorder %s381, %s395
      %p397 = scmp.eq.s32.totalorder %s44, 0
      %p398 = por %p396, %p397
      %s400 = sadd.s32 %s399, 1
      %p403 = scmp.eq.s32.totalorder %s38, 3
      %p404 = scmp.ne.s32.totalorder %s399, %s401
      %p405 = scmp.eq.s32.totalorder %s38, 0
      %p406 = por %p404, %p405
      %p407 = scmp.ne.s32.totalorder %s399, %s401
      %p408 = scmp.eq.s32.totalorder %s43, 3
      %p409 = por %p407, %p408
      %p410 = scmp.ne.s32.totalorder %s401, %s402
      %p411 = scmp.eq.s32.totalorder %s43, 0
      %p412 = por %p410, %p411
      %p413 = scmp.ne.s32.totalorder %s401, %s402
      %p414 = scmp.eq.s32.totalorder %s44, 3
      %p415 = por %p413, %p414
      %p417 = scmp.ne.s32.totalorder %s402, %s416
      %p418 = scmp.eq.s32.totalorder %s44, 0
      %p419 = por %p417, %p418
      %s420 = ssub.s32 %s45, %s57
      %s421 = ssub.s32 %s46, %s53
      %s422 = sor.u32 %s420, %s421
      %p423 = scmp.eq.s32.totalorder %s422, 0
      %s425 = sadd.s32 %s424, 1
      %s426 = scalar_select %p423, %s424, %s425
      %p429 = pneg %p423
      %p430 = scmp.eq.s32.totalorder %s38, 3
      %p431 = por %p429, %p430
      %p432 = scmp.ne.s32.totalorder %s424, %s427
      %p433 = scmp.eq.s32.totalorder %s38, 0
      %p434 = por %p432, %p433
      %p435 = scmp.ne.s32.totalorder %s424, %s427
      %p436 = scmp.eq.s32.totalorder %s43, 3
      %p437 = por %p435, %p436
      %p438 = scmp.ne.s32.totalorder %s427, %s428
      %p439 = scmp.eq.s32.totalorder %s43, 0
      %p440 = por %p438, %p439
      %p441 = scmp.ne.s32.totalorder %s427, %s428
      %p442 = scmp.eq.s32.totalorder %s44, 3
      %p443 = por %p441, %p442
      %p445 = scmp.ne.s32.totalorder %s428, %s444
      %p446 = scmp.eq.s32.totalorder %s44, 0
      %p447 = por %p445, %p446
      %s448 = ssub.s32 %s45, %s57
      %s449 = ssub.s32 %s46, %s53
      %s450 = sor.u32 %s448, %s449
      %p451 = scmp.eq.s32.totalorder %s450, 0
      %s453 = sadd.s32 %s452, 1
      %s454 = scalar_select %p451, %s452, %s453
      %p457 = pneg %p451
      %p458 = scmp.eq.s32.totalorder %s38, 3
      %p459 = por %p457, %p458
      %p460 = scmp.ne.s32.totalorder %s452, %s455
      %p461 = scmp.eq.s32.totalorder %s38, 0
      %p462 = por %p460, %p461
      %p463 = scmp.ne.s32.totalorder %s452, %s455
      %p464 = scmp.eq.s32.totalorder %s43, 3
      %p465 = por %p463, %p464
      %p466 = scmp.ne.s32.totalorder %s455, %s456
      %p467 = scmp.eq.s32.totalorder %s43, 0
      %p468 = por %p466, %p467
      %p469 = scmp.ne.s32.totalorder %s455, %s456
      %p470 = scmp.eq.s32.totalorder %s44, 3
      %p471 = por %p469, %p470
      %p473 = scmp.ne.s32.totalorder %s456, %s472
      %p474 = scmp.eq.s32.totalorder %s44, 0
      %p475 = por %p473, %p474
      %p476 = scmp.le.s32.totalorder 1, %s38
      %p477 = scmp.lt.s32.totalorder %s38, 5
      %p478 = pnand %p476, %p477
      %p479 = pneg %p478
      // Predicated region
      $region9: #{tpu_custom_call.1} parent=5 // pred_check
        _
      $region10: #{tpu_custom_call.1} parent=5 // pred_check_branch
        %481 = sbr.rel (%p478) target = $region12
      $region11: #{tpu_custom_call.1} parent=5 // pred_region
        %s482 = ssub.s32 %s38, 1
        // Predicated region
        $region13: #{tpu_custom_call.1} parent=11 // pred_check
          %p483 = pneg %p97
        $region14: #{tpu_custom_call.1} parent=11 // pred_check_branch
          %485 = sbr.rel (%p483) target = $region16
        $region15: #{tpu_custom_call.1} parent=11 // pred_region
          _
        $region16: #{tpu_custom_call.1} parent=11 // pred_fallthru
          _
        // Predicated region
        $region17: #{tpu_custom_call.1} parent=11 // pred_check
          %p486 = pneg %p118
        $region18: #{tpu_custom_call.1} parent=11 // pred_check_branch
          %488 = sbr.rel (%p486) target = $region20
        $region19: #{tpu_custom_call.1} parent=11 // pred_region
          _
        $region20: #{tpu_custom_call.1} parent=11 // pred_fallthru
          _
        // Predicated region
        $region21: #{tpu_custom_call.1} parent=11 // pred_check
          %p489 = pneg %p139
        $region22: #{tpu_custom_call.1} parent=11 // pred_check_branch
          %491 = sbr.rel (%p489) target = $region24
        $region23: #{tpu_custom_call.1} parent=11 // pred_region
          _
        $region24: #{tpu_custom_call.1} parent=11 // pred_fallthru
          _
        // Predicated region
        $region25: #{tpu_custom_call.1} parent=11 // pred_check
          %p492 = pneg %p160
        $region26: #{tpu_custom_call.1} parent=11 // pred_check_branch
          %494 = sbr.rel (%p492) target = $region28
        $region27: #{tpu_custom_call.1} parent=11 // pred_region
          _
        $region28: #{tpu_custom_call.1} parent=11 // pred_fallthru
          _
        // Predicated region
        $region29: #{tpu_custom_call.1} parent=11 // pred_check
          %p495 = pneg %p181
        $region30: #{tpu_custom_call.1} parent=11 // pred_check_branch
          %497 = sbr.rel (%p495) target = $region32
        $region31: #{tpu_custom_call.1} parent=11 // pred_region
          %s499 = ssub.s32 512, 512
          %500 = vsyncadd [#allocation8], %s499
          %s501 = sshll.u32 [#allocation7], 4
          %s502 = int_to_ptr.vmem [resolvable:$true] %s501
          %507 = dma.hbm_to_vmem [thread:$0]  %s6, 512, %s502, [#allocation8], 128, 128, 8
        $region32: #{tpu_custom_call.1} parent=11 // pred_fallthru
          _
        // Predicated region
        $region33: #{tpu_custom_call.1} parent=11 // pred_check
          %p508 = pneg %p202
        $region34: #{tpu_custom_call.1} parent=11 // pred_check_branch
          %510 = sbr.rel (%p508) target = $region36
        $region35: #{tpu_custom_call.1} parent=11 // pred_region
          _
        $region36: #{tpu_custom_call.1} parent=11 // pred_fallthru
          _
        // Predicated region
        $region37: #{tpu_custom_call.1} parent=11 // pred_check
          %p511 = pneg %p223
        $region38: #{tpu_custom_call.1} parent=11 // pred_check_branch
          %513 = sbr.rel (%p511) target = $region40
        $region39: #{tpu_custom_call.1} parent=11 // pred_region
          %s515 = ssub.s32 512, 512
          %516 = vsyncadd [#allocation11], %s515
          %s517 = sshll.u32 [#allocation10], 4
          %s518 = int_to_ptr.vmem [resolvable:$true] %s517
          %523 = dma.hbm_to_vmem [thread:$0]  %s8, 512, %s518, [#allocation11], 128, 128, 8
        $region40: #{tpu_custom_call.1} parent=11 // pred_fallthru
          _
        // Predicated region
        $region41: #{tpu_custom_call.1} parent=11 // pred_check
          %p524 = pneg %p244
        $region42: #{tpu_custom_call.1} parent=11 // pred_check_branch
          %526 = sbr.rel (%p524) target = $region44
        $region43: #{tpu_custom_call.1} parent=11 // pred_region
          _
        $region44: #{tpu_custom_call.1} parent=11 // pred_fallthru
          _
        // Predicated region
        $region45: #{tpu_custom_call.1} parent=11 // pred_check
          %p527 = pneg %p265
        $region46: #{tpu_custom_call.1} parent=11 // pred_check_branch
          %529 = sbr.rel (%p527) target = $region48
        $region47: #{tpu_custom_call.1} parent=11 // pred_region
          _
        $region48: #{tpu_custom_call.1} parent=11 // pred_fallthru
          _
        // Predicated region
        $region49: #{tpu_custom_call.1} parent=11 // pred_check
          %p530 = pneg %p286
        $region50: #{tpu_custom_call.1} parent=11 // pred_check_branch
          %532 = sbr.rel (%p530) target = $region52
        $region51: #{tpu_custom_call.1} parent=11 // pred_region
          _
        $region52: #{tpu_custom_call.1} parent=11 // pred_fallthru
          _
        // Predicated region
        $region53: #{tpu_custom_call.1} parent=11 // pred_check
          %p533 = pneg %p307
        $region54: #{tpu_custom_call.1} parent=11 // pred_check_branch
          %535 = sbr.rel (%p533) target = $region56
        $region55: #{tpu_custom_call.1} parent=11 // pred_region
          %s537 = ssub.s32 512, 512
          %538 = vsyncadd [#allocation11], %s537
          %s539 = sshll.u32 [#allocation12], 4
          %s540 = int_to_ptr.vmem [resolvable:$true] %s539
          %545 = dma.hbm_to_vmem [thread:$0]  %s12, 512, %s540, [#allocation11], 128, 128, 8
        $region56: #{tpu_custom_call.1} parent=11 // pred_fallthru
          _
        // Predicated region
        $region57: #{tpu_custom_call.1} parent=11 // pred_check
          %p546 = pneg %p328
        $region58: #{tpu_custom_call.1} parent=11 // pred_check_branch
          %548 = sbr.rel (%p546) target = $region60
        $region59: #{tpu_custom_call.1} parent=11 // pred_region
          _
        $region60: #{tpu_custom_call.1} parent=11 // pred_fallthru
          _
        // Predicated region
        $region61: #{tpu_custom_call.1} parent=11 // pred_check
          %p549 = pneg %p349
        $region62: #{tpu_custom_call.1} parent=11 // pred_check_branch
          %551 = sbr.rel (%p549) target = $region64
        $region63: #{tpu_custom_call.1} parent=11 // pred_region
          _
        $region64: #{tpu_custom_call.1} parent=11 // pred_fallthru
          _
        // Predicated region
        $region65: #{tpu_custom_call.1} parent=11 // pred_check
          %p552 = pneg %p370
        $region66: #{tpu_custom_call.1} parent=11 // pred_check_branch
          %554 = sbr.rel (%p552) target = $region68
        $region67: #{tpu_custom_call.1} parent=11 // pred_region
          _
        $region68: #{tpu_custom_call.1} parent=11 // pred_fallthru
          _
        // Predicated region
        $region69: #{tpu_custom_call.1} parent=11 // pred_check
          %p555 = pneg %p391
        $region70: #{tpu_custom_call.1} parent=11 // pred_check_branch
          %557 = sbr.rel (%p555) target = $region72
        $region71: #{tpu_custom_call.1} parent=11 // pred_region
          _
        $region72: #{tpu_custom_call.1} parent=11 // pred_fallthru
          _
        // Predicated region
        $region73: #{tpu_custom_call.1} parent=11 // pred_check
          %p558 = pneg %p412
        $region74: #{tpu_custom_call.1} parent=11 // pred_check_branch
          %560 = sbr.rel (%p558) target = $region76
        $region75: #{tpu_custom_call.1} parent=11 // pred_region
          _
        $region76: #{tpu_custom_call.1} parent=11 // pred_fallthru
          _
      $region12: #{tpu_custom_call.1} parent=5 // pred_fallthru
        _
      %p561 = scmp.lt.s32.totalorder %s38, 4
      // Predicated region
      $region77: #{tpu_custom_call.1} parent=5 // pred_check
        %p562 = pneg %p561
      $region78: #{tpu_custom_call.1} parent=5 // pred_check_branch
        %564 = sbr.rel (%p562) target = $region80
      $region79: #{tpu_custom_call.1} parent=5 // pred_region
        // Predicated region
        $region81: #{tpu_custom_call.1} parent=79 // pred_check
          %p565 = pneg %p70
        $region82: #{tpu_custom_call.1} parent=79 // pred_check_branch
          %567 = sbr.rel (%p565) target = $region84
        $region83: #{tpu_custom_call.1} parent=79 // pred_region
          %p568 = scmp.lt.s32.totalorder %s45, 1
          %s569 = scalar_select %p568, %s45, 1
          %s570 = smul.addr %s569, 2
          %s571 = smul.addr %s570, 8
          %s572 = scalar_lea.vmem %s1, %s571
        $region84: #{tpu_custom_call.1} parent=79 // pred_fallthru
          _
      $region80: #{tpu_custom_call.1} parent=5 // pred_fallthru
        _
      %p573 = scmp.le.s32.totalorder 1, %s38
      %p574 = scmp.lt.s32.totalorder %s38, 5
      %p575 = pnand %p573, %p574
      %p576 = pneg %p575
      // Predicated region
      $region85: #{tpu_custom_call.1} parent=5 // pred_check
        _
      $region86: #{tpu_custom_call.1} parent=5 // pred_check_branch
        %578 = sbr.rel (%p575) target = $region88
      $region87: #{tpu_custom_call.1} parent=5 // pred_region
        %s579 = ssub.s32 %s38, 1
        // Predicated region
        $region89: #{tpu_custom_call.1} parent=87 // pred_check
          %p580 = pneg %p181
        $region90: #{tpu_custom_call.1} parent=87 // pred_check_branch
          %582 = sbr.rel (%p580) target = $region92
        $region91: #{tpu_custom_call.1} parent=87 // pred_region
          %583 = dma.done [#allocation8], 512
        $region92: #{tpu_custom_call.1} parent=87 // pred_fallthru
          _
        // Predicated region
        $region93: #{tpu_custom_call.1} parent=87 // pred_check
          %p584 = pneg %p223
        $region94: #{tpu_custom_call.1} parent=87 // pred_check_branch
          %586 = sbr.rel (%p584) target = $region96
        $region95: #{tpu_custom_call.1} parent=87 // pred_region
          %587 = dma.done [#allocation11], 512
        $region96: #{tpu_custom_call.1} parent=87 // pred_fallthru
          _
        // Predicated region
        $region97: #{tpu_custom_call.1} parent=87 // pred_check
          %p588 = pneg %p307
        $region98: #{tpu_custom_call.1} parent=87 // pred_check_branch
          %590 = sbr.rel (%p588) target = $region100
        $region99: #{tpu_custom_call.1} parent=87 // pred_region
          %591 = dma.done [#allocation11], 512
        $region100: #{tpu_custom_call.1} parent=87 // pred_fallthru
          _
        %p592 = scmp.lt.s32.totalorder %s47, 1
        %s593 = scalar_select %p592, %s47, 1
        %s594 = smul.addr %s593, 2
        %s595 = smul.addr %s594, 8
        %s596 = scalar_lea.vmem %s1, %s595
        %p597 = pneg %p76
        %p598 = pneg %p73
        %p599 = pneg %p97
        %p600 = pneg %p94
        %p601 = pneg %p118
        %p602 = pneg %p115
        %p603 = pneg %p139
        %p604 = pneg %p136
        %p605 = pneg %p160
        %p606 = pneg %p157
        %p607 = pneg %p181
        %p608 = pneg %p178
        %p609 = pneg %p202
        %p610 = pneg %p199
        %p611 = pneg %p223
        %p612 = pneg %p220
        %p613 = pneg %p244
        %p614 = pneg %p241
        %p615 = pneg %p265
        %p616 = pneg %p262
        %p617 = pneg %p286
        %p618 = pneg %p283
        %p619 = pneg %p307
        %p620 = pneg %p304
        %p621 = pneg %p328
        %p622 = pneg %p325
        %p623 = pneg %p349
        %p624 = pneg %p346
        %p625 = pneg %p370
        %p626 = pneg %p367
        %p627 = pneg %p391
        %p628 = pneg %p388
        %p629 = pneg %p412
        %p630 = pneg %p409
        %p631 = pneg %p440
        %p632 = pneg %p437
        %s633 = sand.u32 %s427, 1
        %s634 = scalar_lea.sflag [#allocation9], %s633
        %s635 = sand.u32 %s427, 1
        %s636 = smul.addr %s635, 8
        %s637 = scalar_lea.vmem [#allocation13], %s636
        %p638 = pneg %p468
        %p639 = pneg %p465
        %s640 = sand.u32 %s455, 1
        %s641 = scalar_lea.sflag [#allocation15], %s640
        %s642 = sand.u32 %s455, 1
        %s643 = smul.addr %s642, 16
        %s644 = scalar_lea.vmem [#allocation14], %s643
        %p645 = scmp.lt.s32.totalorder %s47, 1
        %s646 = scalar_select %p645, %s47, 1
        %s647 = smul.addr %s646, 2
        %s648 = smul.addr %s647, 8
        %s649 = scalar_lea.vmem %s1, %s648
        %s650 = sld [smem:[#allocation6 + %s47]]
        %p651 = scmp.eq.s32.totalorder %s48, 0
        // Predicated region
        $region101: #{tpu_custom_call.1} parent=87 // pred_check
          %p652 = pneg %p651
        $region102: #{tpu_custom_call.1} parent=87 // pred_check_branch
          %654 = sbr.rel (%p652) target = $region104
        $region103: #{tpu_custom_call.1} parent=87 // pred_region
          %v655 = vld [vmem:[%s649] sm:$0xff]
          %v656 = vld [vmem:[%s649 + $0x8] sm:$0xff]
          %v657 = vld [vmem:[%s4] sm:$0xff]
          %v658 = vld [vmem:[%s4 + $0x8] sm:$0xff]
          %v659 = vld [vmem:[%s4 + $0x10] sm:$0xff]
          %v660 = vld [vmem:[%s4 + $0x18] sm:$0xff]
          %v661 = vld [vmem:[%s5] sm:$0x1]
          %v663 = vlaneseq
          %v664 = vshrl.u32 %v663, 7
          %v665 = vsub.s32 0, %v664
          %v666 = vrot.slane %v661, %v665
          %vm668 = vcmask 261120
          %v670 = vsel %vm668, %v655, 0
          %v673 = vsel %vm668, %v656, 0
          %675 = vmatprep.subr.mxu0 0.0
          %676 = vmatpush1.msra.mxu0 %v657
          %677 = vmatprep.subr.mxu0 0.0
          %678 = vmatpush1.msra.mxu0 %v658
          %679 = vmatprep.subr.mxu0 0.0
          %680 = vmatpush1.msra.mxu0 %v659
          %681 = vmatprep.subr.mxu0 0.0
          %682 = vmatpush1.msra.mxu0 %v660
          %683 = vmatprep.subr.mxu0 0.0
          %684 = vmatpush1.msra.mxu0 0.0
          %685 = vmatprep.subr.mxu0 0.0
          %686 = vmatpush1.msra.mxu0 0.0
          %687 = vmatprep.subr.mxu0 0.0
          %688 = vmatpush1.msra.mxu0 0.0
          %689 = vmatprep.subr.mxu0 0.0
          %690 = vmatpush1.msra.mxu0 0.0
          %691 = vmatprep.subr.mxu0 0.0
          %692 = vmatpush1.msra.mxu0 0.0
          %693 = vmatprep.subr.mxu0 0.0
          %694 = vmatpush1.msra.mxu0 0.0
          %695 = vmatprep.subr.mxu0 0.0
          %696 = vmatpush1.msra.mxu0 0.0
          %697 = vmatprep.subr.mxu0 0.0
          %698 = vmatpush1.msra.mxu0 0.0
          %699 = vmatprep.subr.mxu0 0.0
          %700 = vmatpush1.msra.mxu0 0.0
          %701 = vmatprep.subr.mxu0 0.0
          %702 = vmatpush1.msra.mxu0 0.0
          %703 = vmatprep.subr.mxu0 0.0
          %704 = vmatpush1.msra.mxu0 0.0
          %705 = vmatprep.subr.mxu0 0.0
          %706 = vmatpush1.msra.mxu0 0.0
          %707 = vmatprep.subr.mxu0 0.0
          %708 = vmatpush1.msra.mxu0 0.0
          %709 = vmatprep.subr.mxu0 0.0
          %710 = vmatpush1.msra.mxu0 0.0
          %711 = vmatprep.subr.mxu0 0.0
          %712 = vmatpush1.msra.mxu0 0.0
          %713 = vmatprep.subr.mxu0 0.0
          %714 = vmatpush1.msra.mxu0 0.0
          %715 = vmatprep.subr.mxu0 0.0
          %716 = vmatpush1.msra.mxu0 0.0
          %717 = vmatprep.subr.mxu0 0.0
          %718 = vmatpush1.msra.mxu0 0.0
          %719 = vmatprep.subr.mxu0 0.0
          %720 = vmatpush1.msra.mxu0 0.0
          %721 = vmatprep.subr.mxu0 0.0
          %722 = vmatpush1.msra.mxu0 0.0
          %723 = vmatprep.subr.mxu0 0.0
          %724 = vmatpush1.msra.mxu0 0.0
          %725 = vmatprep.subr.mxu0 0.0
          %726 = vmatpush1.msra.mxu0 0.0
          %727 = vmatprep.subr.mxu0 0.0
          %728 = vmatpush1.msra.mxu0 0.0
          %729 = vmatprep.subr.mxu0 0.0
          %730 = vmatpush1.msra.mxu0 0.0
          %731 = vmatprep.subr.mxu0 0.0
          %732 = vmatpush1.msra.mxu0 0.0
          %733 = vmatprep.subr.mxu0 0.0
          %734 = vmatpush1.msra.mxu0 0.0
          %735 = vmatprep.subr.mxu0 0.0
          %736 = vmatpush1.msra.mxu0 0.0
          %737 = vmatprep.subr.mxu0 0.0
          %738 = vmatpush1.msra.mxu0 0.0
          %739 = vmatprep.mubr.f32.mxu0 0.0
          %740 = vmatmul.mubr.f32.gmra.mrb[0].mxu0 %v670
          %v741 = vpop.f32.mrb[0].mxu0
          %v742 = vadd.f32 %v666, %v741
          %v743 = vpop.f32.mrb[0].mxu0
          %744 = vmatprep.mubr.f32.mxu0 0.0
          %745 = vmatmul.mubr.f32.gmra.mrb[0].mxu0 %v673
          %v746 = vpop.f32.mrb[0].mxu0
          %v747 = vadd.f32 %v666, %v746
          %v748 = vpop.f32.mrb[0].mxu0
          %749 = vdwg.mxu0
          %750 = vst.msk [vmem:[#allocation2] sm:$0xff] %vm668, %v742
          %751 = vst.msk [vmem:[#allocation2 + $0x8] sm:$0xff] %vm668, %v747
          %v752 = vld [vmem:[#allocation7] sm:$0xff]
          %v753 = vld [vmem:[#allocation7 + $0x8] sm:$0xff]
          %v754 = vld [vmem:[#allocation7 + $0x10] sm:$0xff]
          %v755 = vld [vmem:[#allocation7 + $0x18] sm:$0xff]
          %v756 = vld [vmem:[%s7] sm:$0x1]
          %v758 = vlaneseq
          %v759 = vshrl.u32 %v758, 7
          %v760 = vsub.s32 0, %v759
          %v761 = vrot.slane %v756, %v760
          %763 = vmatprep.subr.mxu0 0.0
          %764 = vmatpush1.msra.mxu0 %v752
          %765 = vmatprep.subr.mxu0 0.0
          %766 = vmatpush1.msra.mxu0 %v753
          %767 = vmatprep.subr.mxu0 0.0
          %768 = vmatpush1.msra.mxu0 %v754
          %769 = vmatprep.subr.mxu0 0.0
          %770 = vmatpush1.msra.mxu0 %v755
          %771 = vmatprep.subr.mxu0 0.0
          %772 = vmatpush1.msra.mxu0 0.0
          %773 = vmatprep.subr.mxu0 0.0
          %774 = vmatpush1.msra.mxu0 0.0
          %775 = vmatprep.subr.mxu0 0.0
          %776 = vmatpush1.msra.mxu0 0.0
          %777 = vmatprep.subr.mxu0 0.0
          %778 = vmatpush1.msra.mxu0 0.0
          %779 = vmatprep.subr.mxu0 0.0
          %780 = vmatpush1.msra.mxu0 0.0
          %781 = vmatprep.subr.mxu0 0.0
          %782 = vmatpush1.msra.mxu0 0.0
          %783 = vmatprep.subr.mxu0 0.0
          %784 = vmatpush1.msra.mxu0 0.0
          %785 = vmatprep.subr.mxu0 0.0
          %786 = vmatpush1.msra.mxu0 0.0
          %787 = vmatprep.subr.mxu0 0.0
          %788 = vmatpush1.msra.mxu0 0.0
          %789 = vmatprep.subr.mxu0 0.0
          %790 = vmatpush1.msra.mxu0 0.0
          %791 = vmatprep.subr.mxu0 0.0
          %792 = vmatpush1.msra.mxu0 0.0
          %793 = vmatprep.subr.mxu0 0.0
          %794 = vmatpush1.msra.mxu0 0.0
          %795 = vmatprep.subr.mxu0 0.0
          %796 = vmatpush1.msra.mxu0 0.0
          %797 = vmatprep.subr.mxu0 0.0
          %798 = vmatpush1.msra.mxu0 0.0
          %799 = vmatprep.subr.mxu0 0.0
          %800 = vmatpush1.msra.mxu0 0.0
          %801 = vmatprep.subr.mxu0 0.0
          %802 = vmatpush1.msra.mxu0 0.0
          %803 = vmatprep.subr.mxu0 0.0
          %804 = vmatpush1.msra.mxu0 0.0
          %805 = vmatprep.subr.mxu0 0.0
          %806 = vmatpush1.msra.mxu0 0.0
          %807 = vmatprep.subr.mxu0 0.0
          %808 = vmatpush1.msra.mxu0 0.0
          %809 = vmatprep.subr.mxu0 0.0
          %810 = vmatpush1.msra.mxu0 0.0
          %811 = vmatprep.subr.mxu0 0.0
          %812 = vmatpush1.msra.mxu0 0.0
          %813 = vmatprep.subr.mxu0 0.0
          %814 = vmatpush1.msra.mxu0 0.0
          %815 = vmatprep.subr.mxu0 0.0
          %816 = vmatpush1.msra.mxu0 0.0
          %817 = vmatprep.subr.mxu0 0.0
          %818 = vmatpush1.msra.mxu0 0.0
          %819 = vmatprep.subr.mxu0 0.0
          %820 = vmatpush1.msra.mxu0 0.0
          %821 = vmatprep.subr.mxu0 0.0
          %822 = vmatpush1.msra.mxu0 0.0
          %823 = vmatprep.subr.mxu0 0.0
          %824 = vmatpush1.msra.mxu0 0.0
          %825 = vmatprep.subr.mxu0 0.0
          %826 = vmatpush1.msra.mxu0 0.0
          %827 = vmatprep.mubr.f32.mxu0 0.0
          %828 = vmatmul.mubr.f32.gmra.mrb[0].mxu0 %v670
          %v829 = vpop.f32.mrb[0].mxu0
          %v830 = vadd.f32 %v761, %v829
          %v831 = vpop.f32.mrb[0].mxu0
          %832 = vmatprep.mubr.f32.mxu0 0.0
          %833 = vmatmul.mubr.f32.gmra.mrb[0].mxu0 %v673
          %v834 = vpop.f32.mrb[0].mxu0
          %v835 = vadd.f32 %v761, %v834
          %v836 = vpop.f32.mrb[0].mxu0
          %837 = vdwg.mxu0
          %838 = vst.msk [vmem:[#allocation3] sm:$0xff] %vm668, %v830
          %839 = vst.msk [vmem:[#allocation3 + $0x8] sm:$0xff] %vm668, %v835
        $region104: #{tpu_custom_call.1} parent=87 // pred_fallthru
          _
        %s840 = smul.u32 %s48, 8
        %s841 = scalar_lea.vmem %s649, %s840
        %v842 = vld [vmem:[%s841] sm:$0xff]
        %v843 = vlaneseq
        %v844 = vand.u32 %v843, 127
        %v845 = vstv %s650
        %vm846 = vcmp.ge.s32.totalorder %v844, %v845
        %v847 = vlaneseq
        %v848 = vshrl.u32 %v847, 7
        %v849 = vstv %s840
        %v850 = vadd.s32 %v849, %v848
        %vm851 = vcmp.lt.s32.totalorder %v850, %v845
        %v852 = vsel %vm851, 1, 0
        %v853 = vcvt.s32.f32 %v852
        %v854 = vld [vmem:[%s2] sm:$0xff]
        %v855 = vld [vmem:[%s2 + $0x8] sm:$0xff]
        %v856 = vld [vmem:[%s2 + $0x10] sm:$0xff]
        %v857 = vld [vmem:[%s2 + $0x18] sm:$0xff]
        %v858 = vld [vmem:[%s3] sm:$0x1]
        %v860 = vlaneseq
        %v861 = vshrl.u32 %v860, 7
        %v862 = vsub.s32 0, %v861
        %v863 = vrot.slane %v858, %v862
        %vm865 = vcmask 261120
        %v867 = vsel %vm865, %v842, 0
        %869 = vmatprep.subr.mxu0 0.0
        %870 = vmatpush1.msra.mxu0 %v854
        %871 = vmatprep.subr.mxu0 0.0
        %872 = vmatpush1.msra.mxu0 %v855
        %873 = vmatprep.subr.mxu0 0.0
        %874 = vmatpush1.msra.mxu0 %v856
        %875 = vmatprep.subr.mxu0 0.0
        %876 = vmatpush1.msra.mxu0 %v857
        %877 = vmatprep.subr.mxu0 0.0
        %878 = vmatpush1.msra.mxu0 0.0
        %879 = vmatprep.subr.mxu0 0.0
        %880 = vmatpush1.msra.mxu0 0.0
        %881 = vmatprep.subr.mxu0 0.0
        %882 = vmatpush1.msra.mxu0 0.0
        %883 = vmatprep.subr.mxu0 0.0
        %884 = vmatpush1.msra.mxu0 0.0
        %885 = vmatprep.subr.mxu0 0.0
        %886 = vmatpush1.msra.mxu0 0.0
        %887 = vmatprep.subr.mxu0 0.0
        %888 = vmatpush1.msra.mxu0 0.0
        %889 = vmatprep.subr.mxu0 0.0
        %890 = vmatpush1.msra.mxu0 0.0
        %891 = vmatprep.subr.mxu0 0.0
        %892 = vmatpush1.msra.mxu0 0.0
        %893 = vmatprep.subr.mxu0 0.0
        %894 = vmatpush1.msra.mxu0 0.0
        %895 = vmatprep.subr.mxu0 0.0
        %896 = vmatpush1.msra.mxu0 0.0
        %897 = vmatprep.subr.mxu0 0.0
        %898 = vmatpush1.msra.mxu0 0.0
        %899 = vmatprep.subr.mxu0 0.0
        %900 = vmatpush1.msra.mxu0 0.0
        %901 = vmatprep.subr.mxu0 0.0
        %902 = vmatpush1.msra.mxu0 0.0
        %903 = vmatprep.subr.mxu0 0.0
        %904 = vmatpush1.msra.mxu0 0.0
        %905 = vmatprep.subr.mxu0 0.0
        %906 = vmatpush1.msra.mxu0 0.0
        %907 = vmatprep.subr.mxu0 0.0
        %908 = vmatpush1.msra.mxu0 0.0
        %909 = vmatprep.subr.mxu0 0.0
        %910 = vmatpush1.msra.mxu0 0.0
        %911 = vmatprep.subr.mxu0 0.0
        %912 = vmatpush1.msra.mxu0 0.0
        %913 = vmatprep.subr.mxu0 0.0
        %914 = vmatpush1.msra.mxu0 0.0
        %915 = vmatprep.subr.mxu0 0.0
        %916 = vmatpush1.msra.mxu0 0.0
        %917 = vmatprep.subr.mxu0 0.0
        %918 = vmatpush1.msra.mxu0 0.0
        %919 = vmatprep.subr.mxu0 0.0
        %920 = vmatpush1.msra.mxu0 0.0
        %921 = vmatprep.subr.mxu0 0.0
        %922 = vmatpush1.msra.mxu0 0.0
        %923 = vmatprep.subr.mxu0 0.0
        %924 = vmatpush1.msra.mxu0 0.0
        %925 = vmatprep.subr.mxu0 0.0
        %926 = vmatpush1.msra.mxu0 0.0
        %927 = vmatprep.subr.mxu0 0.0
        %928 = vmatpush1.msra.mxu0 0.0
        %929 = vmatprep.subr.mxu0 0.0
        %930 = vmatpush1.msra.mxu0 0.0
        %931 = vmatprep.subr.mxu0 0.0
        %932 = vmatpush1.msra.mxu0 0.0
        %933 = vmatprep.mubr.f32.mxu0 0.0
        %934 = vmatmul.mubr.f32.gmra.mrb[0].mxu0 %v867
        %v935 = vpop.f32.mrb[0].mxu0
        %v936 = vadd.f32 %v863, %v935
        %v937 = vpop.f32.mrb[0].mxu0
        %938 = vdwg.mxu0
        %v939 = vld [vmem:[#allocation2] sm:$0xff]
        %v940 = vld [vmem:[#allocation2 + $0x8] sm:$0xff]
        %v941 = vld [vmem:[#allocation3] sm:$0xff]
        %v942 = vld [vmem:[#allocation3 + $0x8] sm:$0xff]
        %vm943 = vcmask 130048
        %v945 = vsel %vm943, %v936, 0
        %v948 = vsel %vm943, %v939, 0
        %v951 = vsel %vm943, %v940, 0
        %953 = vmatprep.subr.mxu0 0.0
        %954 = vmatpush1.xpose.msra.mxu0 %v948
        %955 = vmatprep.subr.mxu0 0.0
        %956 = vmatpush1.xpose.msra.mxu0 %v951
        %957 = vmatprep.subr.mxu0 0.0
        %958 = vmatpush1.xpose.msra.mxu0 0.0
        %959 = vmatprep.subr.mxu0 0.0
        %960 = vmatpush1.xpose.msra.mxu0 0.0
        %961 = vmatprep.subr.mxu0 0.0
        %962 = vmatpush1.xpose.msra.mxu0 0.0
        %963 = vmatprep.subr.mxu0 0.0
        %964 = vmatpush1.xpose.msra.mxu0 0.0
        %965 = vmatprep.subr.mxu0 0.0
        %966 = vmatpush1.xpose.msra.mxu0 0.0
        %967 = vmatprep.subr.mxu0 0.0
        %968 = vmatpush1.xpose.msra.mxu0 0.0
        %969 = vmatprep.subr.mxu0 0.0
        %970 = vmatpush1.xpose.msra.mxu0 0.0
        %971 = vmatprep.subr.mxu0 0.0
        %972 = vmatpush1.xpose.msra.mxu0 0.0
        %973 = vmatprep.subr.mxu0 0.0
        %974 = vmatpush1.xpose.msra.mxu0 0.0
        %975 = vmatprep.subr.mxu0 0.0
        %976 = vmatpush1.xpose.msra.mxu0 0.0
        %977 = vmatprep.subr.mxu0 0.0
        %978 = vmatpush1.xpose.msra.mxu0 0.0
        %979 = vmatprep.subr.mxu0 0.0
        %980 = vmatpush1.xpose.msra.mxu0 0.0
        %981 = vmatprep.subr.mxu0 0.0
        %982 = vmatpush1.xpose.msra.mxu0 0.0
        %983 = vmatprep.subr.mxu0 0.0
        %984 = vmatpush1.xpose.msra.mxu0 0.0
        %985 = vmatprep.subr.mxu0 0.0
        %986 = vmatpush1.xpose.msra.mxu0 0.0
        %987 = vmatprep.subr.mxu0 0.0
        %988 = vmatpush1.xpose.msra.mxu0 0.0
        %989 = vmatprep.subr.mxu0 0.0
        %990 = vmatpush1.xpose.msra.mxu0 0.0
        %991 = vmatprep.subr.mxu0 0.0
        %992 = vmatpush1.xpose.msra.mxu0 0.0
        %993 = vmatprep.subr.mxu0 0.0
        %994 = vmatpush1.xpose.msra.mxu0 0.0
        %995 = vmatprep.subr.mxu0 0.0
        %996 = vmatpush1.xpose.msra.mxu0 0.0
        %997 = vmatprep.subr.mxu0 0.0
        %998 = vmatpush1.xpose.msra.mxu0 0.0
        %999 = vmatprep.subr.mxu0 0.0
        %1000 = vmatpush1.xpose.msra.mxu0 0.0
        %1001 = vmatprep.subr.mxu0 0.0
        %1002 = vmatpush1.xpose.msra.mxu0 0.0
        %1003 = vmatprep.subr.mxu0 0.0
        %1004 = vmatpush1.xpose.msra.mxu0 0.0
        %1005 = vmatprep.subr.mxu0 0.0
        %1006 = vmatpush1.xpose.msra.mxu0 0.0
        %1007 = vmatprep.subr.mxu0 0.0
        %1008 = vmatpush1.xpose.msra.mxu0 0.0
        %1009 = vmatprep.subr.mxu0 0.0
        %1010 = vmatpush1.xpose.msra.mxu0 0.0
        %1011 = vmatprep.subr.mxu0 0.0
        %1012 = vmatpush1.xpose.msra.mxu0 0.0
        %1013 = vmatprep.subr.mxu0 0.0
        %1014 = vmatpush1.xpose.msra.mxu0 0.0
        %1015 = vmatprep.subr.mxu0 0.0
        %1016 = vmatpush1.xpose.msra.mxu0 0.0
        %1017 = vmatprep.mubr.f32.mxu0 0.0
        %1018 = vmatmul.mubr.f32.gmra.mrb[0].mxu0 %v945
        %v1019 = vpop.f32.mrb[0].mxu0
        %v1020 = vadd.f32 0.0, %v1019
        %v1021 = vpop.f32.mrb[0].mxu0
        %1022 = vdwg.mxu0
        %v1023 = vsel %vm846, -inf, %v1020
        %v1024 = vsel %vm943, %v1023, -inf
        %1025 = vmax.xlane.f32.xlu0 %v1024
        %v1026 = vpop.xlane.xlu0 %1025
        %v1027 = vsub.f32 %v1023, %v1026
        %v1028 = vmul.f32 %v1027, 1.442695
        %v1029 = vpow.pop %v1028
        %v1030 = vsel %vm943, %v1029, 0.0
        %1031 = vadd.xlane.f32.xlu0 %v1030
        %v1032 = vpop.xlane.xlu0 %1031
        %v1033 = vrcp.pop %v1032
        %v1034 = vmul.f32 %v1029, %v1033
        %1035 = vst.msk [vmem:[%s644] sm:$0xff] %vm943, %v1034
        %v1037 = vsel %vm943, %v1034, 0
        %1039 = vmatprep.subr.mxu0 0.0
        %1040 = vmatpush1.msra.mxu0 %v941
        %1041 = vmatprep.subr.mxu0 0.0
        %1042 = vmatpush1.msra.mxu0 %v942
        %1043 = vmatprep.subr.mxu0 0.0
        %1044 = vmatpush1.msra.mxu0 0.0
        %1045 = vmatprep.subr.mxu0 0.0
        %1046 = vmatpush1.msra.mxu0 0.0
        %1047 = vmatprep.subr.mxu0 0.0
        %1048 = vmatpush1.msra.mxu0 0.0
        %1049 = vmatprep.subr.mxu0 0.0
        %1050 = vmatpush1.msra.mxu0 0.0
        %1051 = vmatprep.subr.mxu0 0.0
        %1052 = vmatpush1.msra.mxu0 0.0
        %1053 = vmatprep.subr.mxu0 0.0
        %1054 = vmatpush1.msra.mxu0 0.0
        %1055 = vmatprep.subr.mxu0 0.0
        %1056 = vmatpush1.msra.mxu0 0.0
        %1057 = vmatprep.subr.mxu0 0.0
        %1058 = vmatpush1.msra.mxu0 0.0
        %1059 = vmatprep.subr.mxu0 0.0
        %1060 = vmatpush1.msra.mxu0 0.0
        %1061 = vmatprep.subr.mxu0 0.0
        %1062 = vmatpush1.msra.mxu0 0.0
        %1063 = vmatprep.subr.mxu0 0.0
        %1064 = vmatpush1.msra.mxu0 0.0
        %1065 = vmatprep.subr.mxu0 0.0
        %1066 = vmatpush1.msra.mxu0 0.0
        %1067 = vmatprep.subr.mxu0 0.0
        %1068 = vmatpush1.msra.mxu0 0.0
        %1069 = vmatprep.subr.mxu0 0.0
        %1070 = vmatpush1.msra.mxu0 0.0
        %1071 = vmatprep.subr.mxu0 0.0
        %1072 = vmatpush1.msra.mxu0 0.0
        %1073 = vmatprep.subr.mxu0 0.0
        %1074 = vmatpush1.msra.mxu0 0.0
        %1075 = vmatprep.subr.mxu0 0.0
        %1076 = vmatpush1.msra.mxu0 0.0
        %1077 = vmatprep.subr.mxu0 0.0
        %1078 = vmatpush1.msra.mxu0 0.0
        %1079 = vmatprep.subr.mxu0 0.0
        %1080 = vmatpush1.msra.mxu0 0.0
        %1081 = vmatprep.subr.mxu0 0.0
        %1082 = vmatpush1.msra.mxu0 0.0
        %1083 = vmatprep.subr.mxu0 0.0
        %1084 = vmatpush1.msra.mxu0 0.0
        %1085 = vmatprep.subr.mxu0 0.0
        %1086 = vmatpush1.msra.mxu0 0.0
        %1087 = vmatprep.subr.mxu0 0.0
        %1088 = vmatpush1.msra.mxu0 0.0
        %1089 = vmatprep.subr.mxu0 0.0
        %1090 = vmatpush1.msra.mxu0 0.0
        %1091 = vmatprep.subr.mxu0 0.0
        %1092 = vmatpush1.msra.mxu0 0.0
        %1093 = vmatprep.subr.mxu0 0.0
        %1094 = vmatpush1.msra.mxu0 0.0
        %1095 = vmatprep.subr.mxu0 0.0
        %1096 = vmatpush1.msra.mxu0 0.0
        %1097 = vmatprep.subr.mxu0 0.0
        %1098 = vmatpush1.msra.mxu0 0.0
        %1099 = vmatprep.subr.mxu0 0.0
        %1100 = vmatpush1.msra.mxu0 0.0
        %1101 = vmatprep.subr.mxu0 0.0
        %1102 = vmatpush1.msra.mxu0 0.0
        %1103 = vmatprep.mubr.f32.mxu0 0.0
        %1104 = vmatmul.mubr.f32.gmra.mrb[0].mxu0 %v1037
        %v1105 = vpop.f32.mrb[0].mxu0
        %v1106 = vadd.f32 0.0, %v1105
        %v1107 = vpop.f32.mrb[0].mxu0
        %1108 = vdwg.mxu0
        %1109 = vst.msk [vmem:[#allocation4] sm:$0xff] %vm943, %v1106
        %v1110 = vld [vmem:[#allocation2] sm:$0xff]
        %v1111 = vld [vmem:[#allocation2 + $0x8] sm:$0xff]
        %v1112 = vld [vmem:[#allocation3] sm:$0xff]
        %v1113 = vld [vmem:[#allocation3 + $0x8] sm:$0xff]
        %1114 = vrot.lane.b32.xlu0 %v936, 112
        %v1115 = vpop.permute.xlu0 %1114
        %1118 = vrot.lane.b32.xlu0 %v1110, 112
        %v1119 = vpop.permute.xlu0 %1118
        %1120 = vrot.lane.b32.xlu0 %v1111, 112
        %v1121 = vpop.permute.xlu0 %1120
        %v1122 = vsel %vm943, %v1115, 0
        %v1124 = vsel %vm943, %v1119, 0
        %v1126 = vsel %vm943, %v1121, 0
        %1128 = vmatprep.subr.mxu0 0.0
        %1129 = vmatpush1.xpose.msra.mxu0 %v1124
        %1130 = vmatprep.subr.mxu0 0.0
        %1131 = vmatpush1.xpose.msra.mxu0 %v1126
        %1132 = vmatprep.subr.mxu0 0.0
        %1133 = vmatpush1.xpose.msra.mxu0 0.0
        %1134 = vmatprep.subr.mxu0 0.0
        %1135 = vmatpush1.xpose.msra.mxu0 0.0
        %1136 = vmatprep.subr.mxu0 0.0
        %1137 = vmatpush1.xpose.msra.mxu0 0.0
        %1138 = vmatprep.subr.mxu0 0.0
        %1139 = vmatpush1.xpose.msra.mxu0 0.0
        %1140 = vmatprep.subr.mxu0 0.0
        %1141 = vmatpush1.xpose.msra.mxu0 0.0
        %1142 = vmatprep.subr.mxu0 0.0
        %1143 = vmatpush1.xpose.msra.mxu0 0.0
        %1144 = vmatprep.subr.mxu0 0.0
        %1145 = vmatpush1.xpose.msra.mxu0 0.0
        %1146 = vmatprep.subr.mxu0 0.0
        %1147 = vmatpush1.xpose.msra.mxu0 0.0
        %1148 = vmatprep.subr.mxu0 0.0
        %1149 = vmatpush1.xpose.msra.mxu0 0.0
        %1150 = vmatprep.subr.mxu0 0.0
        %1151 = vmatpush1.xpose.msra.mxu0 0.0
        %1152 = vmatprep.subr.mxu0 0.0
        %1153 = vmatpush1.xpose.msra.mxu0 0.0
        %1154 = vmatprep.subr.mxu0 0.0
        %1155 = vmatpush1.xpose.msra.mxu0 0.0
        %1156 = vmatprep.subr.mxu0 0.0
        %1157 = vmatpush1.xpose.msra.mxu0 0.0
        %1158 = vmatprep.subr.mxu0 0.0
        %1159 = vmatpush1.xpose.msra.mxu0 0.0
        %1160 = vmatprep.subr.mxu0 0.0
        %1161 = vmatpush1.xpose.msra.mxu0 0.0
        %1162 = vmatprep.subr.mxu0 0.0
        %1163 = vmatpush1.xpose.msra.mxu0 0.0
        %1164 = vmatprep.subr.mxu0 0.0
        %1165 = vmatpush1.xpose.msra.mxu0 0.0
        %1166 = vmatprep.subr.mxu0 0.0
        %1167 = vmatpush1.xpose.msra.mxu0 0.0
        %1168 = vmatprep.subr.mxu0 0.0
        %1169 = vmatpush1.xpose.msra.mxu0 0.0
        %1170 = vmatprep.subr.mxu0 0.0
        %1171 = vmatpush1.xpose.msra.mxu0 0.0
        %1172 = vmatprep.subr.mxu0 0.0
        %1173 = vmatpush1.xpose.msra.mxu0 0.0
        %1174 = vmatprep.subr.mxu0 0.0
        %1175 = vmatpush1.xpose.msra.mxu0 0.0
        %1176 = vmatprep.subr.mxu0 0.0
        %1177 = vmatpush1.xpose.msra.mxu0 0.0
        %1178 = vmatprep.subr.mxu0 0.0
        %1179 = vmatpush1.xpose.msra.mxu0 0.0
        %1180 = vmatprep.subr.mxu0 0.0
        %1181 = vmatpush1.xpose.msra.mxu0 0.0
        %1182 = vmatprep.subr.mxu0 0.0
        %1183 = vmatpush1.xpose.msra.mxu0 0.0
        %1184 = vmatprep.subr.mxu0 0.0
        %1185 = vmatpush1.xpose.msra.mxu0 0.0
        %1186 = vmatprep.subr.mxu0 0.0
        %1187 = vmatpush1.xpose.msra.mxu0 0.0
        %1188 = vmatprep.subr.mxu0 0.0
        %1189 = vmatpush1.xpose.msra.mxu0 0.0
        %1190 = vmatprep.subr.mxu0 0.0
        %1191 = vmatpush1.xpose.msra.mxu0 0.0
        %1192 = vmatprep.mubr.f32.mxu0 0.0
        %1193 = vmatmul.mubr.f32.gmra.mrb[0].mxu0 %v1122
        %v1194 = vpop.f32.mrb[0].mxu0
        %v1195 = vadd.f32 0.0, %v1194
        %v1196 = vpop.f32.mrb[0].mxu0
        %1197 = vdwg.mxu0
        %v1198 = vsel %vm846, -inf, %v1195
        %v1199 = vsel %vm943, %v1198, -inf
        %1200 = vmax.xlane.f32.xlu0 %v1199
        %v1201 = vpop.xlane.xlu0 %1200
        %v1202 = vsub.f32 %v1198, %v1201
        %v1203 = vmul.f32 %v1202, 1.442695
        %v1204 = vpow.pop %v1203
        %v1205 = vsel %vm943, %v1204, 0.0
        %1206 = vadd.xlane.f32.xlu0 %v1205
        %v1207 = vpop.xlane.xlu0 %1206
        %v1208 = vrcp.pop %v1207
        %v1209 = vmul.f32 %v1204, %v1208
        %s1210 = scalar_lea.vmem %s644, 8 [#allocation14]
        %1211 = vst.msk [vmem:[%s1210] sm:$0xff] %vm943, %v1209
        %1214 = vrot.lane.b32.xlu0 %v1112, 112
        %v1215 = vpop.permute.xlu0 %1214
        %1216 = vrot.lane.b32.xlu0 %v1113, 112
        %v1217 = vpop.permute.xlu0 %1216
        %v1221 = vsel %vm943, %v1209, 0
        %1223 = vmatprep.subr.mxu0 0.0
        %1224 = vmatpush1.msra.mxu0 %v1215
        %1225 = vmatprep.subr.mxu0 0.0
        %1226 = vmatpush1.msra.mxu0 %v1217
        %1227 = vmatprep.subr.mxu0 0.0
        %1228 = vmatpush1.msra.mxu0 0.0
        %1229 = vmatprep.subr.mxu0 0.0
        %1230 = vmatpush1.msra.mxu0 0.0
        %1231 = vmatprep.subr.mxu0 0.0
        %1232 = vmatpush1.msra.mxu0 0.0
        %1233 = vmatprep.subr.mxu0 0.0
        %1234 = vmatpush1.msra.mxu0 0.0
        %1235 = vmatprep.subr.mxu0 0.0
        %1236 = vmatpush1.msra.mxu0 0.0
        %1237 = vmatprep.subr.mxu0 0.0
        %1238 = vmatpush1.msra.mxu0 0.0
        %1239 = vmatprep.subr.mxu0 0.0
        %1240 = vmatpush1.msra.mxu0 0.0
        %1241 = vmatprep.subr.mxu0 0.0
        %1242 = vmatpush1.msra.mxu0 0.0
        %1243 = vmatprep.subr.mxu0 0.0
        %1244 = vmatpush1.msra.mxu0 0.0
        %1245 = vmatprep.subr.mxu0 0.0
        %1246 = vmatpush1.msra.mxu0 0.0
        %1247 = vmatprep.subr.mxu0 0.0
        %1248 = vmatpush1.msra.mxu0 0.0
        %1249 = vmatprep.subr.mxu0 0.0
        %1250 = vmatpush1.msra.mxu0 0.0
        %1251 = vmatprep.subr.mxu0 0.0
        %1252 = vmatpush1.msra.mxu0 0.0
        %1253 = vmatprep.subr.mxu0 0.0
        %1254 = vmatpush1.msra.mxu0 0.0
        %1255 = vmatprep.subr.mxu0 0.0
        %1256 = vmatpush1.msra.mxu0 0.0
        %1257 = vmatprep.subr.mxu0 0.0
        %1258 = vmatpush1.msra.mxu0 0.0
        %1259 = vmatprep.subr.mxu0 0.0
        %1260 = vmatpush1.msra.mxu0 0.0
        %1261 = vmatprep.subr.mxu0 0.0
        %1262 = vmatpush1.msra.mxu0 0.0
        %1263 = vmatprep.subr.mxu0 0.0
        %1264 = vmatpush1.msra.mxu0 0.0
        %1265 = vmatprep.subr.mxu0 0.0
        %1266 = vmatpush1.msra.mxu0 0.0
        %1267 = vmatprep.subr.mxu0 0.0
        %1268 = vmatpush1.msra.mxu0 0.0
        %1269 = vmatprep.subr.mxu0 0.0
        %1270 = vmatpush1.msra.mxu0 0.0
        %1271 = vmatprep.subr.mxu0 0.0
        %1272 = vmatpush1.msra.mxu0 0.0
        %1273 = vmatprep.subr.mxu0 0.0
        %1274 = vmatpush1.msra.mxu0 0.0
        %1275 = vmatprep.subr.mxu0 0.0
        %1276 = vmatpush1.msra.mxu0 0.0
        %1277 = vmatprep.subr.mxu0 0.0
        %1278 = vmatpush1.msra.mxu0 0.0
        %1279 = vmatprep.subr.mxu0 0.0
        %1280 = vmatpush1.msra.mxu0 0.0
        %1281 = vmatprep.subr.mxu0 0.0
        %1282 = vmatpush1.msra.mxu0 0.0
        %1283 = vmatprep.subr.mxu0 0.0
        %1284 = vmatpush1.msra.mxu0 0.0
        %1285 = vmatprep.subr.mxu0 0.0
        %1286 = vmatpush1.msra.mxu0 0.0
        %1287 = vmatprep.mubr.f32.mxu0 0.0
        %1288 = vmatmul.mubr.f32.gmra.mrb[0].mxu0 %v1221
        %v1289 = vpop.f32.mrb[0].mxu0
        %v1290 = vadd.f32 0.0, %v1289
        %v1291 = vpop.f32.mrb[0].mxu0
        %1292 = vdwg.mxu0
        %1294 = vrot.lane.b32.xlu0 %v1290, 16
        %v1295 = vpop.permute.xlu0 %1294
        %vm1297 = vcmask 261248
        %1298 = vst.msk [vmem:[#allocation4] sm:$0xff] %vm1297, %v1295
        %v1299 = vld [vmem:[#allocation4] sm:$0xff]
        %v1300 = vld [vmem:[#allocation10] sm:$0xff]
        %v1301 = vld [vmem:[#allocation10 + $0x8] sm:$0xff]
        %v1302 = vld [vmem:[#allocation10 + $0x10] sm:$0xff]
        %v1303 = vld [vmem:[#allocation10 + $0x18] sm:$0xff]
        %v1304 = vld [vmem:[%s9] sm:$0x1]
        %v1306 = vlaneseq
        %v1307 = vshrl.u32 %v1306, 7
        %v1308 = vsub.s32 0, %v1307
        %v1309 = vrot.slane %v1304, %v1308
        %v1312 = vsel %vm865, %v1299, 0
        %1314 = vmatprep.subr.mxu0 0.0
        %1315 = vmatpush1.msra.mxu0 %v1300
        %1316 = vmatprep.subr.mxu0 0.0
        %1317 = vmatpush1.msra.mxu0 %v1301
        %1318 = vmatprep.subr.mxu0 0.0
        %1319 = vmatpush1.msra.mxu0 %v1302
        %1320 = vmatprep.subr.mxu0 0.0
        %1321 = vmatpush1.msra.mxu0 %v1303
        %1322 = vmatprep.subr.mxu0 0.0
        %1323 = vmatpush1.msra.mxu0 0.0
        %1324 = vmatprep.subr.mxu0 0.0
        %1325 = vmatpush1.msra.mxu0 0.0
        %1326 = vmatprep.subr.mxu0 0.0
        %1327 = vmatpush1.msra.mxu0 0.0
        %1328 = vmatprep.subr.mxu0 0.0
        %1329 = vmatpush1.msra.mxu0 0.0
        %1330 = vmatprep.subr.mxu0 0.0
        %1331 = vmatpush1.msra.mxu0 0.0
        %1332 = vmatprep.subr.mxu0 0.0
        %1333 = vmatpush1.msra.mxu0 0.0
        %1334 = vmatprep.subr.mxu0 0.0
        %1335 = vmatpush1.msra.mxu0 0.0
        %1336 = vmatprep.subr.mxu0 0.0
        %1337 = vmatpush1.msra.mxu0 0.0
        %1338 = vmatprep.subr.mxu0 0.0
        %1339 = vmatpush1.msra.mxu0 0.0
        %1340 = vmatprep.subr.mxu0 0.0
        %1341 = vmatpush1.msra.mxu0 0.0
        %1342 = vmatprep.subr.mxu0 0.0
        %1343 = vmatpush1.msra.mxu0 0.0
        %1344 = vmatprep.subr.mxu0 0.0
        %1345 = vmatpush1.msra.mxu0 0.0
        %1346 = vmatprep.subr.mxu0 0.0
        %1347 = vmatpush1.msra.mxu0 0.0
        %1348 = vmatprep.subr.mxu0 0.0
        %1349 = vmatpush1.msra.mxu0 0.0
        %1350 = vmatprep.subr.mxu0 0.0
        %1351 = vmatpush1.msra.mxu0 0.0
        %1352 = vmatprep.subr.mxu0 0.0
        %1353 = vmatpush1.msra.mxu0 0.0
        %1354 = vmatprep.subr.mxu0 0.0
        %1355 = vmatpush1.msra.mxu0 0.0
        %1356 = vmatprep.subr.mxu0 0.0
        %1357 = vmatpush1.msra.mxu0 0.0
        %1358 = vmatprep.subr.mxu0 0.0
        %1359 = vmatpush1.msra.mxu0 0.0
        %1360 = vmatprep.subr.mxu0 0.0
        %1361 = vmatpush1.msra.mxu0 0.0
        %1362 = vmatprep.subr.mxu0 0.0
        %1363 = vmatpush1.msra.mxu0 0.0
        %1364 = vmatprep.subr.mxu0 0.0
        %1365 = vmatpush1.msra.mxu0 0.0
        %1366 = vmatprep.subr.mxu0 0.0
        %1367 = vmatpush1.msra.mxu0 0.0
        %1368 = vmatprep.subr.mxu0 0.0
        %1369 = vmatpush1.msra.mxu0 0.0
        %1370 = vmatprep.subr.mxu0 0.0
        %1371 = vmatpush1.msra.mxu0 0.0
        %1372 = vmatprep.subr.mxu0 0.0
        %1373 = vmatpush1.msra.mxu0 0.0
        %1374 = vmatprep.subr.mxu0 0.0
        %1375 = vmatpush1.msra.mxu0 0.0
        %1376 = vmatprep.subr.mxu0 0.0
        %1377 = vmatpush1.msra.mxu0 0.0
        %1378 = vmatprep.mubr.f32.mxu0 0.0
        %1379 = vmatmul.mubr.f32.gmra.mrb[0].mxu0 %v1312
        %v1380 = vpop.f32.mrb[0].mxu0
        %v1381 = vadd.f32 %v1309, %v1380
        %v1382 = vpop.f32.mrb[0].mxu0
        %1383 = vdwg.mxu0
        %v1384 = vadd.f32 %v1381, %v842
        %v1385 = vld [vmem:[%s10] sm:$0x1]
        %v1386 = vld [vmem:[%s11] sm:$0x1]
        %v1387 = vsel %vm865, %v1384, 0.0
        %1388 = vadd.xlane.f32.xlu0 %v1387
        %v1389 = vpop.xlane.xlu0 %1388
        %v1390 = vrcp.pop 32.0
        %v1391 = vmul.f32 %v1389, %v1390
        %v1392 = vsub.f32 %v1384, %v1391
        %v1393 = vmul.f32 %v1392, %v1392
        %v1394 = vsel %vm865, %v1393, 0.0
        %1395 = vadd.xlane.f32.xlu0 %v1394
        %v1396 = vpop.xlane.xlu0 %1395
        %v1397 = vmul.f32 %v1396, %v1390
        %v1398 = vadd.f32 %v1397, 1e-05
        %v1399 = vrsqrt.pop %v1398
        %v1400 = vmul.f32 %v1392, %v1399
        %v1402 = vlaneseq
        %v1403 = vshrl.u32 %v1402, 7
        %v1404 = vsub.s32 0, %v1403
        %v1405 = vrot.slane %v1385, %v1404
        %v1407 = vmul.f32 %v1400, %v1405
        %v1409 = vlaneseq
        %v1410 = vshrl.u32 %v1409, 7
        %v1411 = vsub.s32 0, %v1410
        %v1412 = vrot.slane %v1386, %v1411
        %v1414 = vadd.f32 %v1407, %v1412
        %v1415 = vmul.f32 %v1414, %v853
        %v1416 = vld [vmem:[#allocation12] sm:$0xff]
        %v1417 = vld [vmem:[#allocation12 + $0x8] sm:$0xff]
        %v1418 = vld [vmem:[#allocation12 + $0x10] sm:$0xff]
        %v1419 = vld [vmem:[#allocation12 + $0x18] sm:$0xff]
        %v1420 = vld [vmem:[%s13] sm:$0x1]
        %v1422 = vlaneseq
        %v1423 = vshrl.u32 %v1422, 7
        %v1424 = vsub.s32 0, %v1423
        %v1425 = vrot.slane %v1420, %v1424
        %v1428 = vsel %vm865, %v1415, 0
        %1430 = vmatprep.subr.mxu0 0.0
        %1431 = vmatpush1.msra.mxu0 %v1416
        %1432 = vmatprep.subr.mxu0 0.0
        %1433 = vmatpush1.msra.mxu0 %v1417
        %1434 = vmatprep.subr.mxu0 0.0
        %1435 = vmatpush1.msra.mxu0 %v1418
        %1436 = vmatprep.subr.mxu0 0.0
        %1437 = vmatpush1.msra.mxu0 %v1419
        %1438 = vmatprep.subr.mxu0 0.0
        %1439 = vmatpush1.msra.mxu0 0.0
        %1440 = vmatprep.subr.mxu0 0.0
        %1441 = vmatpush1.msra.mxu0 0.0
        %1442 = vmatprep.subr.mxu0 0.0
        %1443 = vmatpush1.msra.mxu0 0.0
        %1444 = vmatprep.subr.mxu0 0.0
        %1445 = vmatpush1.msra.mxu0 0.0
        %1446 = vmatprep.subr.mxu0 0.0
        %1447 = vmatpush1.msra.mxu0 0.0
        %1448 = vmatprep.subr.mxu0 0.0
        %1449 = vmatpush1.msra.mxu0 0.0
        %1450 = vmatprep.subr.mxu0 0.0
        %1451 = vmatpush1.msra.mxu0 0.0
        %1452 = vmatprep.subr.mxu0 0.0
        %1453 = vmatpush1.msra.mxu0 0.0
        %1454 = vmatprep.subr.mxu0 0.0
        %1455 = vmatpush1.msra.mxu0 0.0
        %1456 = vmatprep.subr.mxu0 0.0
        %1457 = vmatpush1.msra.mxu0 0.0
        %1458 = vmatprep.subr.mxu0 0.0
        %1459 = vmatpush1.msra.mxu0 0.0
        %1460 = vmatprep.subr.mxu0 0.0
        %1461 = vmatpush1.msra.mxu0 0.0
        %1462 = vmatprep.subr.mxu0 0.0
        %1463 = vmatpush1.msra.mxu0 0.0
        %1464 = vmatprep.subr.mxu0 0.0
        %1465 = vmatpush1.msra.mxu0 0.0
        %1466 = vmatprep.subr.mxu0 0.0
        %1467 = vmatpush1.msra.mxu0 0.0
        %1468 = vmatprep.subr.mxu0 0.0
        %1469 = vmatpush1.msra.mxu0 0.0
        %1470 = vmatprep.subr.mxu0 0.0
        %1471 = vmatpush1.msra.mxu0 0.0
        %1472 = vmatprep.subr.mxu0 0.0
        %1473 = vmatpush1.msra.mxu0 0.0
        %1474 = vmatprep.subr.mxu0 0.0
        %1475 = vmatpush1.msra.mxu0 0.0
        %1476 = vmatprep.subr.mxu0 0.0
        %1477 = vmatpush1.msra.mxu0 0.0
        %1478 = vmatprep.subr.mxu0 0.0
        %1479 = vmatpush1.msra.mxu0 0.0
        %1480 = vmatprep.subr.mxu0 0.0
        %1481 = vmatpush1.msra.mxu0 0.0
        %1482 = vmatprep.subr.mxu0 0.0
        %1483 = vmatpush1.msra.mxu0 0.0
        %1484 = vmatprep.subr.mxu0 0.0
        %1485 = vmatpush1.msra.mxu0 0.0
        %1486 = vmatprep.subr.mxu0 0.0
        %1487 = vmatpush1.msra.mxu0 0.0
        %1488 = vmatprep.subr.mxu0 0.0
        %1489 = vmatpush1.msra.mxu0 0.0
        %1490 = vmatprep.subr.mxu0 0.0
        %1491 = vmatpush1.msra.mxu0 0.0
        %1492 = vmatprep.subr.mxu0 0.0
        %1493 = vmatpush1.msra.mxu0 0.0
        %1494 = vmatprep.mubr.f32.mxu0 0.0
        %1495 = vmatmul.mubr.f32.gmra.mrb[0].mxu0 %v1428
        %v1496 = vpop.f32.mrb[0].mxu0
        %v1497 = vadd.f32 %v1425, %v1496
        %v1498 = vpop.f32.mrb[0].mxu0
        %1499 = vdwg.mxu0
        %v1500 = vmax.f32 %v1497, 0.0
        %v1501 = vld [vmem:[%s14] sm:$0xff]
        %v1502 = vld [vmem:[%s14 + $0x8] sm:$0xff]
        %v1503 = vld [vmem:[%s14 + $0x10] sm:$0xff]
        %v1504 = vld [vmem:[%s14 + $0x18] sm:$0xff]
        %v1505 = vld [vmem:[%s14 + $0x20] sm:$0xff]
        %v1506 = vld [vmem:[%s14 + $0x28] sm:$0xff]
        %v1507 = vld [vmem:[%s14 + $0x30] sm:$0xff]
        %v1508 = vld [vmem:[%s14 + $0x38] sm:$0xff]
        %v1509 = vld [vmem:[%s15] sm:$0x1]
        %v1511 = vlaneseq
        %v1512 = vshrl.u32 %v1511, 7
        %v1513 = vsub.s32 0, %v1512
        %v1514 = vrot.slane %v1509, %v1513
        %vm1516 = vcmask 523264
        %v1518 = vsel %vm1516, %v1500, 0
        %1520 = vmatprep.subr.mxu0 0.0
        %1521 = vmatpush1.msra.mxu0 %v1501
        %1522 = vmatprep.subr.mxu0 0.0
        %1523 = vmatpush1.msra.mxu0 %v1502
        %1524 = vmatprep.subr.mxu0 0.0
        %1525 = vmatpush1.msra.mxu0 %v1503
        %1526 = vmatprep.subr.mxu0 0.0
        %1527 = vmatpush1.msra.mxu0 %v1504
        %1528 = vmatprep.subr.mxu0 0.0
        %1529 = vmatpush1.msra.mxu0 %v1505
        %1530 = vmatprep.subr.mxu0 0.0
        %1531 = vmatpush1.msra.mxu0 %v1506
        %1532 = vmatprep.subr.mxu0 0.0
        %1533 = vmatpush1.msra.mxu0 %v1507
        %1534 = vmatprep.subr.mxu0 0.0
        %1535 = vmatpush1.msra.mxu0 %v1508
        %1536 = vmatprep.subr.mxu0 0.0
        %1537 = vmatpush1.msra.mxu0 0.0
        %1538 = vmatprep.subr.mxu0 0.0
        %1539 = vmatpush1.msra.mxu0 0.0
        %1540 = vmatprep.subr.mxu0 0.0
        %1541 = vmatpush1.msra.mxu0 0.0
        %1542 = vmatprep.subr.mxu0 0.0
        %1543 = vmatpush1.msra.mxu0 0.0
        %1544 = vmatprep.subr.mxu0 0.0
        %1545 = vmatpush1.msra.mxu0 0.0
        %1546 = vmatprep.subr.mxu0 0.0
        %1547 = vmatpush1.msra.mxu0 0.0
        %1548 = vmatprep.subr.mxu0 0.0
        %1549 = vmatpush1.msra.mxu0 0.0
        %1550 = vmatprep.subr.mxu0 0.0
        %1551 = vmatpush1.msra.mxu0 0.0
        %1552 = vmatprep.subr.mxu0 0.0
        %1553 = vmatpush1.msra.mxu0 0.0
        %1554 = vmatprep.subr.mxu0 0.0
        %1555 = vmatpush1.msra.mxu0 0.0
        %1556 = vmatprep.subr.mxu0 0.0
        %1557 = vmatpush1.msra.mxu0 0.0
        %1558 = vmatprep.subr.mxu0 0.0
        %1559 = vmatpush1.msra.mxu0 0.0
        %1560 = vmatprep.subr.mxu0 0.0
        %1561 = vmatpush1.msra.mxu0 0.0
        %1562 = vmatprep.subr.mxu0 0.0
        %1563 = vmatpush1.msra.mxu0 0.0
        %1564 = vmatprep.subr.mxu0 0.0
        %1565 = vmatpush1.msra.mxu0 0.0
        %1566 = vmatprep.subr.mxu0 0.0
        %1567 = vmatpush1.msra.mxu0 0.0
        %1568 = vmatprep.subr.mxu0 0.0
        %1569 = vmatpush1.msra.mxu0 0.0
        %1570 = vmatprep.subr.mxu0 0.0
        %1571 = vmatpush1.msra.mxu0 0.0
        %1572 = vmatprep.subr.mxu0 0.0
        %1573 = vmatpush1.msra.mxu0 0.0
        %1574 = vmatprep.subr.mxu0 0.0
        %1575 = vmatpush1.msra.mxu0 0.0
        %1576 = vmatprep.subr.mxu0 0.0
        %1577 = vmatpush1.msra.mxu0 0.0
        %1578 = vmatprep.subr.mxu0 0.0
        %1579 = vmatpush1.msra.mxu0 0.0
        %1580 = vmatprep.subr.mxu0 0.0
        %1581 = vmatpush1.msra.mxu0 0.0
        %1582 = vmatprep.subr.mxu0 0.0
        %1583 = vmatpush1.msra.mxu0 0.0
        %1584 = vmatprep.mubr.f32.mxu0 0.0
        %1585 = vmatmul.mubr.f32.gmra.mrb[0].mxu0 %v1518
        %v1586 = vpop.f32.mrb[0].mxu0
        %v1587 = vadd.f32 %v1514, %v1586
        %v1588 = vpop.f32.mrb[0].mxu0
        %1589 = vdwg.mxu0
        %v1590 = vadd.f32 %v1587, %v1415
        %v1591 = vld [vmem:[%s16] sm:$0x1]
        %v1592 = vld [vmem:[%s17] sm:$0x1]
        %v1593 = vsel %vm865, %v1590, 0.0
        %1594 = vadd.xlane.f32.xlu0 %v1593
        %v1595 = vpop.xlane.xlu0 %1594
        %v1596 = vmul.f32 %v1595, %v1390
        %v1597 = vsub.f32 %v1590, %v1596
        %v1598 = vmul.f32 %v1597, %v1597
        %v1599 = vsel %vm865, %v1598, 0.0
        %1600 = vadd.xlane.f32.xlu0 %v1599
        %v1601 = vpop.xlane.xlu0 %1600
        %v1602 = vmul.f32 %v1601, %v1390
        %v1603 = vadd.f32 %v1602, 1e-05
        %v1604 = vrsqrt.pop %v1603
        %v1605 = vmul.f32 %v1597, %v1604
        %v1607 = vlaneseq
        %v1608 = vshrl.u32 %v1607, 7
        %v1609 = vsub.s32 0, %v1608
        %v1610 = vrot.slane %v1591, %v1609
        %v1612 = vmul.f32 %v1605, %v1610
        %v1614 = vlaneseq
        %v1615 = vshrl.u32 %v1614, 7
        %v1616 = vsub.s32 0, %v1615
        %v1617 = vrot.slane %v1592, %v1616
        %v1619 = vadd.f32 %v1612, %v1617
        %v1620 = vmul.f32 %v1619, %v853
        %1621 = vst.msk [vmem:[%s637] sm:$0xff] %vm865, %v1620
        %s1622 = sand.u32 %s427, 1
        %s1623 = scalar_lea.sflag [#allocation9], %s1622
        %s1624 = sand.u32 %s427, 1
        %s1625 = smul.addr %s1624, 8
        %s1626 = scalar_lea.vmem [#allocation13], %s1625
        %s1627 = sand.u32 %s455, 1
        %s1628 = scalar_lea.sflag [#allocation15], %s1627
        %s1629 = sand.u32 %s455, 1
        %s1630 = smul.addr %s1629, 16
        %s1631 = scalar_lea.vmem [#allocation14], %s1630
        // Predicated region
        $region105: #{tpu_custom_call.1} parent=87 // pred_check
          %p1632 = pneg %p437
        $region106: #{tpu_custom_call.1} parent=87 // pred_check_branch
          %1634 = sbr.rel (%p1632) target = $region108
        $region107: #{tpu_custom_call.1} parent=87 // pred_region
          %s1636 = ssub.s32 128, 128
          %1637 = vsyncadd %s1623, %s1636
          %s1638 = smul.addr %s47, 2
          %s1639 = sadd.s32 %s48, %s1638
          %s1640 = smul.addr %s1639, 128
          %s1641 = scalar_lea.hbm %s18, %s1640
          %s1643 = sshll.u32 %s1626, 4
          %s1644 = int_to_ptr.vmem [resolvable:$true] %s1643
          %1646 = dma.vmem_to_hbm [thread:$0]  %s1644, 128, %s1641, %s1623
        $region108: #{tpu_custom_call.1} parent=87 // pred_fallthru
          _
        // Predicated region
        $region109: #{tpu_custom_call.1} parent=87 // pred_check
          %p1647 = pneg %p465
        $region110: #{tpu_custom_call.1} parent=87 // pred_check_branch
          %1649 = sbr.rel (%p1647) target = $region112
        $region111: #{tpu_custom_call.1} parent=87 // pred_region
          %s1651 = ssub.s32 256, 256
          %1652 = vsyncadd %s1628, %s1651
          %s1653 = smul.addr %s47, 2
          %s1654 = sadd.s32 %s48, %s1653
          %s1655 = smul.addr %s1654, 128
          %s1656 = scalar_lea.hbm %s19, %s1655
          %s1657 = sshll.u32 %s1631, 4
          %s1658 = int_to_ptr.vmem [resolvable:$true] %s1657
          %1663 = dma.vmem_to_hbm [thread:$0]  %s1658, 256, %s1656, %s1628, 128, 512, 8
        $region112: #{tpu_custom_call.1} parent=87 // pred_fallthru
          _
      $region88: #{tpu_custom_call.1} parent=5 // pred_fallthru
        _
      %p1664 = scmp.le.s32.totalorder 2, %s38
      // Predicated region
      $region113: #{tpu_custom_call.1} parent=5 // pred_check
        %p1665 = pneg %p1664
      $region114: #{tpu_custom_call.1} parent=5 // pred_check_branch
        %1667 = sbr.rel (%p1665) target = $region116
      $region115: #{tpu_custom_call.1} parent=5 // pred_region
        %s1668 = ssub.s32 %s38, 2
        // Predicated region
        $region117: #{tpu_custom_call.1} parent=115 // pred_check
          %p1669 = pneg %p443
        $region118: #{tpu_custom_call.1} parent=115 // pred_check_branch
          %1671 = sbr.rel (%p1669) target = $region120
        $region119: #{tpu_custom_call.1} parent=115 // pred_region
          %s1672 = sand.u32 %s428, 1
          %s1673 = scalar_lea.sflag [#allocation9], %s1672
          %s1674 = sand.u32 %s428, 1
          %s1675 = smul.addr %s1674, 8
          %s1676 = scalar_lea.vmem [#allocation13], %s1675
          %1677 = dma.done %s1673, 128
        $region120: #{tpu_custom_call.1} parent=115 // pred_fallthru
          _
        // Predicated region
        $region121: #{tpu_custom_call.1} parent=115 // pred_check
          %p1678 = pneg %p471
        $region122: #{tpu_custom_call.1} parent=115 // pred_check_branch
          %1680 = sbr.rel (%p1678) target = $region124
        $region123: #{tpu_custom_call.1} parent=115 // pred_region
          %s1681 = sand.u32 %s456, 1
          %s1682 = scalar_lea.sflag [#allocation15], %s1681
          %s1683 = sand.u32 %s456, 1
          %s1684 = smul.addr %s1683, 16
          %s1685 = scalar_lea.vmem [#allocation14], %s1684
          %1686 = dma.done %s1682, 256
        $region124: #{tpu_custom_call.1} parent=115 // pred_fallthru
          _
      $region116: #{tpu_custom_call.1} parent=5 // pred_fallthru
        _
    $region6: #{tpu_custom_call.1} parent=1 // loop_footer
      %s42 = sadd.s32 1, %s38
    $region7: #{tpu_custom_call.1} parent=1 // loop_footer_branch
      %37 = sbr.rel target = $region3
    $region8: #{tpu_custom_call.1} parent=1 // loop_exit
      _
    %1687 = vsyncpa [#allocation8], 1
    %s1688 = scalar_lea.sflag [#allocation8], 1
    %1689 = vsyncpa %s1688, 1
    %1690 = vsyncpa [#allocation11], 1
    %1691 = vsyncpa [#allocation9], 1
    %s1692 = scalar_lea.sflag [#allocation9], 1
    %1693 = vsyncpa %s1692, 1
    %1694 = vsyncpa [#allocation15], 1
    %s1695 = scalar_lea.sflag [#allocation15], 1
    %1696 = vsyncpa %s1695, 1

</llo_original>
